<compile_context>
chip_gen: v7x
topology: tpu7x:2x2x1
jax: 0.10.0
libtpu: 0.0.40
codegen_flags: <defaults>
</compile_context>

<pallas_src>
import functools

import numpy as np
import jax
import jax.numpy as jnp
from jax.experimental import pallas as pl
from jax.experimental.pallas import tpu as pltpu


def _adaptive_avg_pool_matrix(L: int, P: int) -> jnp.ndarray:
    """(P, L) matrix M s.t. M @ seq == AdaptiveAvgPool1d(P) along length L."""
    W = np.zeros((P, L), dtype=np.float32)
    for i in range(P):
        s = (i * L) // P
        e = -((-(i + 1) * L) // P)  # ceil((i+1)*L / P)
        W[i, s:e] = 1.0 / (e - s)
    return jnp.asarray(W)


def _anchor_attn_kernel(x_ref, w_ref, b_ref, pool_ref, o_ref, *,
                        compute_dtype, approx_recip):
    # x_ref   : (Bt, D, L)  block of Bt batches of the NCW input (== x^T).
    # w_ref   : (3D, D)     stacked [Wq; Wk; Wv], PyTorch (out, in) layout.
    # b_ref   : (3D, 1)     stacked [bq; bk; bv] (always f32).
    # pool_ref: (P, L)      adaptive-avg-pool averaging matrix.
    # o_ref   : (Bt, D, L)  r^T, i.e. the NCW output block (no wrapper transpose).
    Bt, D, L = x_ref.shape
    P = pool_ref.shape[0]

    def _norm(p, axis):
        s = jnp.sum(p, axis=axis, keepdims=True)
        if approx_recip:
            return p * pl.reciprocal(s, approx=True)   # EUP slot, ~free
        return p / s                                   # exact path

    # In-kernel cast of x (no extra HBM pass in the wrapper).
    x = x_ref[...].astype(compute_dtype)                              # (Bt, D, L)
    w = jnp.broadcast_to(w_ref[...], (Bt, 3 * D, D))                  # (Bt, 3D, D)

    # Fused QKV projection per batch: (3D, D) @ (D, L) with f32 accumulation.
    qkv = jnp.einsum("bod,bdl->bol", w, x,
                     preferred_element_type=jnp.float32)              # (Bt, 3D, L)
    qkv = qkv + b_ref[...][None]                                      # + (1, 3D, 1)

    q_t = qkv[:, 0 * D:1 * D, :].astype(compute_dtype)                # (Bt, D, L) == q^T
    k_t = qkv[:, 1 * D:2 * D, :].astype(compute_dtype)                # (Bt, D, L) == k^T
    v_t = qkv[:, 2 * D:3 * D, :].astype(compute_dtype)                # (Bt, D, L) == v^T

    pool = jnp.broadcast_to(pool_ref[...], (Bt, P, L))                # (Bt, P, L)

    # a = pool @ k  : contract L  -> (Bt, P, D)
    a = jnp.einsum("bpl,bdl->bpd", pool, k_t,
                   preferred_element_type=jnp.float32)
    a_c = a.astype(compute_dtype)

    # s1 = a @ k^T : (P, D) x (D, L) -> (P, L); softmax over L (axis -1), f32.
    s1 = jnp.einsum("bpd,bdl->bpl", a_c, k_t,
                    preferred_element_type=jnp.float32)
    s1 = s1 - jnp.max(s1, axis=-1, keepdims=True)
    p1 = _norm(jnp.exp(s1), axis=-1)                                  # (Bt, P, L)

    # c^T = v^T @ p1^T : contract L -> (Bt, D, P)   (c = p1 @ v of the module)
    c_t = jnp.einsum("bdl,bpl->bdp", v_t, p1.astype(compute_dtype),
                     preferred_element_type=jnp.float32)

    # s2^T = (q @ a^T)^T = a @ q^T : (P, L); softmax of s2 over P == axis 1 here.
    s2t = jnp.einsum("bpd,bdl->bpl", a_c, q_t,
                     preferred_element_type=jnp.float32)
    s2t = s2t - jnp.max(s2t, axis=1, keepdims=True)
    p2t = _norm(jnp.exp(s2t), axis=1)                                 # (Bt, P, L)

    # r^T = c^T @ p2^T : (D, P) @ (P, L) -> (D, L) == NCW output directly.
    r_t = jnp.einsum("bdp,bpl->bdl", c_t.astype(compute_dtype),
                     p2t.astype(compute_dtype),
                     preferred_element_type=jnp.float32)              # (Bt, D, L)
    o_ref[...] = r_t.astype(o_ref.dtype)


def _per_batch_vmem_bytes(D, L, P):
    return (2 * 2 * D * L * 4        # double-buffered x/out blocks (f32)
            + 3 * D * L * 4          # f32 qkv intermediate
            + 3 * D * L * 2          # bf16 q/k/v operand copies
            + 6 * P * L * 4          # s1/p1/s2t/p2t temporaries (+ slack)
            + 4 * P * D * 4)         # a, c


def _pick_block_b(B, D, L, P, budget_bytes=40 * 1024 * 1024):
    bt = int(max(1, min(B, budget_bytes // max(_per_batch_vmem_bytes(D, L, P), 1))))
    while B % bt:                    # need a divisor of B for a clean grid
        bt -= 1
    return bt


def anchor_self_attention_1d(x_ncw, params, pool_len, *,
                             mxu_dtype=jnp.bfloat16, block_b=None):
    """x_ncw: (B, dim, L). Returns (B, dim, L), matching the PyTorch module.

    mxu_dtype: dtype for MXU matmul operands (default bf16; accumulation and
    all softmax math stay f32).  Pass None for a full-f32, exact-divide path.
    """
    B, D, L = x_ncw.shape
    P = pool_len

    # Fuse the three Linear layers: one (3D, D) weight + one (3D, 1) bias.
    w_qkv = jnp.concatenate([params["wq"], params["wk"], params["wv"]], axis=0)
    b_qkv = jnp.concatenate(
        [params["bq"], params["bk"], params["bv"]]).reshape(3 * D, 1)
    pool_mat = _adaptive_avg_pool_matrix(L, P)                        # (P, L)

    compute_dtype = mxu_dtype if mxu_dtype is not None else jnp.float32
    # Only the tiny constants are pre-cast in the wrapper (halves their
    # per-step DMA); x itself is cast INSIDE the kernel (no extra HBM pass).
    w_qkv = w_qkv.astype(compute_dtype)
    pool_mat = pool_mat.astype(compute_dtype)

    Bt = block_b if block_b is not None else _pick_block_b(B, D, L, P)
    assert B % Bt == 0, "block_b must divide the batch size"
    grid = (B // Bt,)

    footprint = (Bt * _per_batch_vmem_bytes(D, L, P)
                 + 2 * (3 * D * D + 3 * D + P * L) * 4 + (1 << 20))
    vmem_limit = int(min(56 * 1024 * 1024,
                         max(16 * 1024 * 1024, 2 * footprint)))

    kernel = functools.partial(_anchor_attn_kernel,
                               compute_dtype=compute_dtype,
                               approx_recip=mxu_dtype is not None)

    def _full(shape):
        return pl.BlockSpec(shape, lambda b: (0,) * len(shape))

    return pl.pallas_call(
        kernel,
        out_shape=jax.ShapeDtypeStruct((B, D, L), x_ncw.dtype),
        grid_spec=pltpu.PrefetchScalarGridSpec(
            num_scalar_prefetch=0,
            grid=grid,
            in_specs=[
                pl.BlockSpec((Bt, D, L), lambda b: (b, 0, 0)),        # x (NCW)
                _full((3 * D, D)),                                    # fused W_qkv
                _full((3 * D, 1)),                                    # fused bias
                _full((P, L)),                                        # pool matrix
            ],
            out_specs=pl.BlockSpec((Bt, D, L), lambda b: (b, 0, 0)),
        ),
        compiler_params=pltpu.CompilerParams(
            dimension_semantics=("parallel",),
            vmem_limit_bytes=vmem_limit),
    )(x_ncw, w_qkv, b_qkv, pool_mat)


def _reference(x_ncw, params, pool_len):
    """Pure-JAX reference mirroring the PyTorch forward."""
    x = jnp.transpose(x_ncw, (0, 2, 1))                               # (B, L, D)
    q = x @ params["wq"].T + params["bq"]
    k = x @ params["wk"].T + params["bk"]
    v = x @ params["wv"].T + params["bv"]
    L = x.shape[1]
    pool = _adaptive_avg_pool_matrix(L, pool_len)
    a = jnp.einsum("pl,bld->bpd", pool, k)
    c = jax.nn.softmax(a @ jnp.swapaxes(k, -1, -2), axis=-1) @ v
    r = jax.nn.softmax(q @ jnp.swapaxes(a, -1, -2), axis=-1) @ c
    return jnp.transpose(r, (0, 2, 1))


if __name__ == "__main__":
    B, D, L, P = 8, 32, 128, 5

    key = jax.random.PRNGKey(0)
    kx, kwq, kbq, kwk, kbk, kwv, kbv = jax.random.split(key, 7)

    bound = 1.0 / np.sqrt(D)
    params = {
        "wq": jax.random.uniform(kwq, (D, D), jnp.float32, -bound, bound),
        "bq": jax.random.uniform(kbq, (D,), jnp.float32, -bound, bound),
        "wk": jax.random.uniform(kwk, (D, D), jnp.float32, -bound, bound),
        "bk": jax.random.uniform(kbk, (D,), jnp.float32, -bound, bound),
        "wv": jax.random.uniform(kwv, (D, D), jnp.float32, -bound, bound),
        "bv": jax.random.uniform(kbv, (D,), jnp.float32, -bound, bound),
    }
    x = jax.random.normal(kx, (B, D, L), jnp.float32)                 # NCW input

    ref = jax.block_until_ready(_reference(x, params, P))

    # 1) Reference-accuracy path: f32 MXU operands + exact softmax divide,
    #    explicit block_b=4 so the multi-step grid (2 steps of 4 batches) runs.
    out_f32 = jax.block_until_ready(
        anchor_self_attention_1d(x, params, P, mxu_dtype=None, block_b=4))
    assert out_f32.shape == (B, D, L)
    np.testing.assert_allclose(np.asarray(out_f32), np.asarray(ref),
                               rtol=2e-3, atol=2e-3)

    # 2) Default perf path: bf16 MXU operands (f32 accumulation/softmax) +
    #    approx reciprocal + auto batch blocking.  Looser tolerance covers the
    #    bf16 operand rounding.
    out_bf16 = jax.block_until_ready(anchor_self_attention_1d(x, params, P))
    assert out_bf16.shape == (B, D, L)
    np.testing.assert_allclose(np.asarray(out_bf16), np.asarray(ref),
                               rtol=2e-2, atol=2e-2)

    print("KERNEL_OK")
</pallas_src>

<mosaic_0001>
module attributes {stable_mosaic.version = 11 : i64} {
  func.func @_anchor_attn_kernel(%arg0: i32, %arg1: memref<4x32x128xf32, #tpu.memory_space<vmem>>, %arg2: memref<96x32xf32, #tpu.memory_space<vmem>>, %arg3: memref<96x1xf32, #tpu.memory_space<vmem>>, %arg4: memref<5x128xf32, #tpu.memory_space<vmem>>, %arg5: memref<4x32x128xf32, #tpu.memory_space<vmem>>) attributes {dimension_semantics = [#tpu.dimension_semantics<parallel>], iteration_bounds = array<i64: 2>, scalar_prefetch = 0 : i64, scratch_operands = 0 : i64, tpu.core_type = #tpu.core_type<tc>, window_params = [{transform_indices = @transform_0, window_bounds = array<i64: 4, 32, 128>}, {pipeline_mode = #tpu.pipeline_mode<synchronous>, transform_indices = @transform_1, window_bounds = array<i64: 96, 32>}, {pipeline_mode = #tpu.pipeline_mode<synchronous>, transform_indices = @transform_2, window_bounds = array<i64: 96, 1>}, {pipeline_mode = #tpu.pipeline_mode<synchronous>, transform_indices = @transform_3, window_bounds = array<i64: 5, 128>}, {transform_indices = @transform_4, window_bounds = array<i64: 4, 32, 128>}]} {
    %c0 = arith.constant 0 : index
    %c0_0 = arith.constant 0 : index
    %c0_1 = arith.constant 0 : index
    %0 = vector.load %arg1[%c0, %c0_0, %c0_1] : memref<4x32x128xf32, #tpu.memory_space<vmem>>, vector<4x32x128xf32>
    %c0_2 = arith.constant 0 : index
    %c0_3 = arith.constant 0 : index
    %1 = vector.load %arg2[%c0_2, %c0_3] : memref<96x32xf32, #tpu.memory_space<vmem>>, vector<96x32xf32>
    %2 = vector.shape_cast %1 : vector<96x32xf32> to vector<1x96x32xf32>
    %3 = vector.broadcast %2 : vector<1x96x32xf32> to vector<4x96x32xf32>
    "tpu.trace_start"() <{level = 10 : i32, message = "bod,bdl->bol"}> : () -> ()
    %cst = arith.constant dense<0.000000e+00> : vector<4x96x128xf32>
    %4 = tpu.matmul %3, %0, %cst {dimension_numbers = #tpu.dot_dimension_numbers<[2], [1], [1], [2], [0, 0, 0, 1, 1, 2], [0], [0]>} : vector<4x96x32xf32>, vector<4x32x128xf32>, vector<4x96x128xf32> -> vector<4x96x128xf32>
    "tpu.trace_stop"() : () -> ()
    %c0_4 = arith.constant 0 : index
    %c0_5 = arith.constant 0 : index
    %5 = vector.load %arg3[%c0_4, %c0_5] : memref<96x1xf32, #tpu.memory_space<vmem>>, vector<96x1xf32>
    %6 = vector.shape_cast %5 : vector<96x1xf32> to vector<1x96x1xf32>
    %7 = vector.broadcast %6 : vector<1x96x1xf32> to vector<4x96x128xf32>
    %8 = arith.addf %4, %7 : vector<4x96x128xf32>
    %9 = vector.extract_strided_slice %8 {offsets = [0, 0, 0], sizes = [4, 32, 128], strides = [1, 1, 1]} : vector<4x96x128xf32> to vector<4x32x128xf32>
    %10 = vector.extract_strided_slice %8 {offsets = [0, 32, 0], sizes = [4, 32, 128], strides = [1, 1, 1]} : vector<4x96x128xf32> to vector<4x32x128xf32>
    %11 = vector.extract_strided_slice %8 {offsets = [0, 64, 0], sizes = [4, 32, 128], strides = [1, 1, 1]} : vector<4x96x128xf32> to vector<4x32x128xf32>
    %c0_6 = arith.constant 0 : index
    %c0_7 = arith.constant 0 : index
    %12 = vector.load %arg4[%c0_6, %c0_7] : memref<5x128xf32, #tpu.memory_space<vmem>>, vector<5x128xf32>
    %13 = vector.shape_cast %12 : vector<5x128xf32> to vector<1x5x128xf32>
    %14 = vector.broadcast %13 : vector<1x5x128xf32> to vector<4x5x128xf32>
    "tpu.trace_start"() <{level = 10 : i32, message = "bpl,bdl->bpd"}> : () -> ()
    %cst_8 = arith.constant dense<0.000000e+00> : vector<4x5x32xf32>
    %15 = tpu.matmul %14, %10, %cst_8 {dimension_numbers = #tpu.dot_dimension_numbers<[2], [2], [1], [1], [0, 0, 0, 1, 1, 1], [0], [0]>} : vector<4x5x128xf32>, vector<4x32x128xf32>, vector<4x5x32xf32> -> vector<4x5x32xf32>
    "tpu.trace_stop"() : () -> ()
    "tpu.trace_start"() <{level = 10 : i32, message = "bpd,bdl->bpl"}> : () -> ()
    %cst_9 = arith.constant dense<0.000000e+00> : vector<4x5x128xf32>
    %16 = tpu.matmul %15, %10, %cst_9 {dimension_numbers = #tpu.dot_dimension_numbers<[2], [1], [1], [2], [0, 0, 0, 1, 1, 2], [0], [0]>} : vector<4x5x32xf32>, vector<4x32x128xf32>, vector<4x5x128xf32> -> vector<4x5x128xf32>
    "tpu.trace_stop"() : () -> ()
    %cst_10 = arith.constant dense<0xFF800000> : vector<4x5xf32>
    %17 = vector.multi_reduction <maximumf>, %16, %cst_10 [2] : vector<4x5x128xf32> to vector<4x5xf32>
    %18 = vector.shape_cast %17 : vector<4x5xf32> to vector<4x5x1xf32>
    %19 = vector.broadcast %18 : vector<4x5x1xf32> to vector<4x5x128xf32>
    %20 = arith.subf %16, %19 : vector<4x5x128xf32>
    %21 = math.exp %20 : vector<4x5x128xf32>
    %cst_11 = arith.constant dense<0.000000e+00> : vector<4x5xf32>
    %22 = vector.multi_reduction <add>, %21, %cst_11 [2] : vector<4x5x128xf32> to vector<4x5xf32>
    %23 = vector.shape_cast %22 : vector<4x5xf32> to vector<4x5x1xf32>
    %24 = vector.broadcast %23 : vector<4x5x1xf32> to vector<4x5x128xf32>
    %25 = arith.divf %21, %24 : vector<4x5x128xf32>
    "tpu.trace_start"() <{level = 10 : i32, message = "bdl,bpl->bdp"}> : () -> ()
    %cst_12 = arith.constant dense<0.000000e+00> : vector<4x32x5xf32>
    %26 = tpu.matmul %11, %25, %cst_12 {dimension_numbers = #tpu.dot_dimension_numbers<[2], [2], [1], [1], [0, 0, 0, 1, 1, 1], [0], [0]>} : vector<4x32x128xf32>, vector<4x5x128xf32>, vector<4x32x5xf32> -> vector<4x32x5xf32>
    "tpu.trace_stop"() : () -> ()
    "tpu.trace_start"() <{level = 10 : i32, message = "bpd,bdl->bpl"}> : () -> ()
    %cst_13 = arith.constant dense<0.000000e+00> : vector<4x5x128xf32>
    %27 = tpu.matmul %15, %9, %cst_13 {dimension_numbers = #tpu.dot_dimension_numbers<[2], [1], [1], [2], [0, 0, 0, 1, 1, 2], [0], [0]>} : vector<4x5x32xf32>, vector<4x32x128xf32>, vector<4x5x128xf32> -> vector<4x5x128xf32>
    "tpu.trace_stop"() : () -> ()
    %cst_14 = arith.constant dense<0xFF800000> : vector<4x128xf32>
    %28 = vector.multi_reduction <maximumf>, %27, %cst_14 [1] : vector<4x5x128xf32> to vector<4x128xf32>
    %29 = vector.shape_cast %28 : vector<4x128xf32> to vector<4x1x128xf32>
    %30 = vector.broadcast %29 : vector<4x1x128xf32> to vector<4x5x128xf32>
    %31 = arith.subf %27, %30 : vector<4x5x128xf32>
    %32 = math.exp %31 : vector<4x5x128xf32>
    %cst_15 = arith.constant dense<0.000000e+00> : vector<4x128xf32>
    %33 = vector.multi_reduction <add>, %32, %cst_15 [1] : vector<4x5x128xf32> to vector<4x128xf32>
    %34 = vector.shape_cast %33 : vector<4x128xf32> to vector<4x1x128xf32>
    %35 = vector.broadcast %34 : vector<4x1x128xf32> to vector<4x5x128xf32>
    %36 = arith.divf %32, %35 : vector<4x5x128xf32>
    "tpu.trace_start"() <{level = 10 : i32, message = "bdp,bpl->bdl"}> : () -> ()
    %cst_16 = arith.constant dense<0.000000e+00> : vector<4x32x128xf32>
    %37 = tpu.matmul %26, %36, %cst_16 {dimension_numbers = #tpu.dot_dimension_numbers<[2], [1], [1], [2], [0, 0, 0, 1, 1, 2], [0], [0]>} : vector<4x32x5xf32>, vector<4x5x128xf32>, vector<4x32x128xf32> -> vector<4x32x128xf32>
    "tpu.trace_stop"() : () -> ()
    %c0_17 = arith.constant 0 : index
    %c0_18 = arith.constant 0 : index
    %c0_19 = arith.constant 0 : index
    %38 = vector.load %arg5[%c0_17, %c0_18, %c0_19] : memref<4x32x128xf32, #tpu.memory_space<vmem>>, vector<4x32x128xf32>
    tpu.vector_store %arg5[%c0_17, %c0_18, %c0_19], %37 {strides = array<i32>} : memref<4x32x128xf32, #tpu.memory_space<vmem>>, vector<4x32x128xf32>,
    return
  }
  func.func @transform_0(%arg0: i32) -> (i32, i32, i32) {
    %c0_i32 = arith.constant 0 : i32
    %c0_i32_0 = arith.constant 0 : i32
    %c0_i32_1 = arith.constant 0 : i32
    return %arg0, %c0_i32, %c0_i32_0 : i32, i32, i32
  }
  func.func @transform_1(%arg0: i32) -> (i32, i32) {
    %c0_i32 = arith.constant 0 : i32
    %c0_i32_0 = arith.constant 0 : i32
    %c0_i32_1 = arith.constant 0 : i32
    return %c0_i32, %c0_i32_0 : i32, i32
  }
  func.func @transform_2(%arg0: i32) -> (i32, i32) {
    %c0_i32 = arith.constant 0 : i32
    %c0_i32_0 = arith.constant 0 : i32
    %c0_i32_1 = arith.constant 0 : i32
    return %c0_i32, %c0_i32_0 : i32, i32
  }
  func.func @transform_3(%arg0: i32) -> (i32, i32) {
    %c0_i32 = arith.constant 0 : i32
    %c0_i32_0 = arith.constant 0 : i32
    %c0_i32_1 = arith.constant 0 : i32
    return %c0_i32, %c0_i32_0 : i32, i32
  }
  func.func @transform_4(%arg0: i32) -> (i32, i32, i32) {
    %c0_i32 = arith.constant 0 : i32
    %c0_i32_0 = arith.constant 0 : i32
    %c0_i32_1 = arith.constant 0 : i32
    return %arg0, %c0_i32, %c0_i32_0 : i32, i32, i32
  }
}

</mosaic_0001>

<llo_original>
// kernel: tpu_custom_call.1
$region0: #{tpu_custom_call.1}
  #allocation0 [shape = 'u32[]', space=smem, size = 0x4, offset = 0x4, fixed_abs, tag = 'smem constant byte address 0x4 - core index']
  #allocation1 [shape = 'u32[144,128]{1,0:T(1,128)}', space=vmem, size = 0x12000, scoped, tag = 'internal scratch']
  %s0 = inlined_call_operand.hbm [shape: f32[8,32,128], index: 0, kind: input, shape index: {}]
  %s1 = inlined_call_operand.vmem [shape: f32[96,32], index: 1, kind: input, shape index: {}]
  %s2 = inlined_call_operand.vmem [shape: f32[96,1], index: 2, kind: input, shape index: {}]
  %s3 = inlined_call_operand.vmem [shape: f32[5,128], index: 3, kind: input, shape index: {}]
  %s4 = inlined_call_operand.hbm [shape: f32[8,32,128], index: 4, kind: output, shape index: {}]
  %s5 = sld [smem:[#allocation0]]
  $region53: #{tpu_custom_call.1} parent=0
    _
  %s7 = ssub.s32 1, %s5
  %s8 = scalar_select 0, %s7, %s5
  $region1: #{tpu_custom_call.1} parent=0
    #allocation2 [shape = 'u8[131072]{0}', space=vmem, size = 0x20000, scoped, tag = 'input window, operand 0']
    #allocation3 [shape = 's32[2]{0}', space=sflag, size = 0x8, scoped, tag = 'scoped memory for tpu_custom_call.1']
    #allocation4 [shape = 's32[2]{0}', space=sflag, size = 0x8, scoped, tag = 'scoped memory for tpu_custom_call.1']
    #allocation5 [shape = 'u8[131072]{0}', space=vmem, size = 0x20000, scoped, tag = 'output window, operand 0']
    %9 = vsyncpa [#allocation3], 0
    %s10 = scalar_lea.sflag [#allocation3], 1
    %11 = vsyncpa %s10, 0
    %12 = vsyncpa [#allocation4], 0
    %s13 = scalar_lea.sflag [#allocation4], 1
    %14 = vsyncpa %s13, 0
    loop: start=0, step=1, limit=4
    $region2: #{tpu_custom_call.1} parent=1 // loop_pre_header
      _
    $region3: #{tpu_custom_call.1} parent=1 // loop_header
      %s16 = sphi 0, %s20
      %p17 = scmp.ge.s32.totalorder %s16, 4
      %s26 = sphi 0, %s28
      %s29 = sphi 0, %s26
      %s30 = sphi 0, %s29
      %s46 = sphi 0, %s30
      %s50 = sphi 0, %s50
      %s52 = sphi 0, %s50
      %s53 = sphi 0, %s52
      %s67 = sphi 0, %s53
      %s71 = sphi 0, %s71
      %s73 = sphi 0, %s71
      %s74 = sphi 0, %s73
      %s88 = sphi 0, %s74
      %s92 = sphi 0, %s92
      %s94 = sphi 0, %s92
      %s95 = sphi 0, %s94
      %s109 = sphi 0, %s95
      %s115 = sphi 0, %s117
      %s118 = sphi 0, %s115
      %s119 = sphi 0, %s118
      %s135 = sphi 0, %s119
    $region4: #{tpu_custom_call.1} parent=1 // loop_header_branch
      %19 = sbr.rel (%p17) target = $region8
    $region5: #{tpu_custom_call.1} parent=1 // loop_body
      %s21 = ssub.s32 %s16, 1
      %s22 = ssub.s32 %s16, 2
      %s23 = sadd.s32 %s16, 1
      %s24 = ssub.s32 %s16, %s23
      %p25 = scmp.eq.s32.totalorder %s24, 0
      %s27 = sadd.s32 %s26, 1
      %s28 = scalar_select %p25, %s26, %s27
      %p31 = pneg %p25
      %p32 = scmp.eq.s32.totalorder %s16, 1
      %p33 = por %p31, %p32
      %p34 = scmp.ne.s32.totalorder %s26, %s29
      %p35 = scmp.eq.s32.totalorder %s16, 0
      %p36 = por %p34, %p35
      %p37 = scmp.ne.s32.totalorder %s26, %s29
      %p38 = scmp.eq.s32.totalorder %s21, 1
      %p39 = por %p37, %p38
      %p40 = scmp.ne.s32.totalorder %s29, %s30
      %p41 = scmp.eq.s32.totalorder %s21, 0
      %p42 = por %p40, %p41
      %p43 = scmp.ne.s32.totalorder %s29, %s30
      %p44 = scmp.eq.s32.totalorder %s22, 1
      %p45 = por %p43, %p44
      %p47 = scmp.ne.s32.totalorder %s30, %s46
      %p48 = scmp.eq.s32.totalorder %s22, 0
      %p49 = por %p47, %p48
      %s51 = sadd.s32 %s50, 1
      %p54 = scmp.eq.s32.totalorder %s16, 1
      %p55 = scmp.ne.s32.totalorder %s50, %s52
      %p56 = scmp.eq.s32.totalorder %s16, 0
      %p57 = por %p55, %p56
      %p58 = scmp.ne.s32.totalorder %s50, %s52
      %p59 = scmp.eq.s32.totalorder %s21, 1
      %p60 = por %p58, %p59
      %p61 = scmp.ne.s32.totalorder %s52, %s53
      %p62 = scmp.eq.s32.totalorder %s21, 0
      %p63 = por %p61, %p62
      %p64 = scmp.ne.s32.totalorder %s52, %s53
      %p65 = scmp.eq.s32.totalorder %s22, 1
      %p66 = por %p64, %p65
      %p68 = scmp.ne.s32.totalorder %s53, %s67
      %p69 = scmp.eq.s32.totalorder %s22, 0
      %p70 = por %p68, %p69
      %s72 = sadd.s32 %s71, 1
      %p75 = scmp.eq.s32.totalorder %s16, 1
      %p76 = scmp.ne.s32.totalorder %s71, %s73
      %p77 = scmp.eq.s32.totalorder %s16, 0
      %p78 = por %p76, %p77
      %p79 = scmp.ne.s32.totalorder %s71, %s73
      %p80 = scmp.eq.s32.totalorder %s21, 1
      %p81 = por %p79, %p80
      %p82 = scmp.ne.s32.totalorder %s73, %s74
      %p83 = scmp.eq.s32.totalorder %s21, 0
      %p84 = por %p82, %p83
      %p85 = scmp.ne.s32.totalorder %s73, %s74
      %p86 = scmp.eq.s32.totalorder %s22, 1
      %p87 = por %p85, %p86
      %p89 = scmp.ne.s32.totalorder %s74, %s88
      %p90 = scmp.eq.s32.totalorder %s22, 0
      %p91 = por %p89, %p90
      %s93 = sadd.s32 %s92, 1
      %p96 = scmp.eq.s32.totalorder %s16, 1
      %p97 = scmp.ne.s32.totalorder %s92, %s94
      %p98 = scmp.eq.s32.totalorder %s16, 0
      %p99 = por %p97, %p98
      %p100 = scmp.ne.s32.totalorder %s92, %s94
      %p101 = scmp.eq.s32.totalorder %s21, 1
      %p102 = por %p100, %p101
      %p103 = scmp.ne.s32.totalorder %s94, %s95
      %p104 = scmp.eq.s32.totalorder %s21, 0
      %p105 = por %p103, %p104
      %p106 = scmp.ne.s32.totalorder %s94, %s95
      %p107 = scmp.eq.s32.totalorder %s22, 1
      %p108 = por %p106, %p107
      %p110 = scmp.ne.s32.totalorder %s95, %s109
      %p111 = scmp.eq.s32.totalorder %s22, 0
      %p112 = por %p110, %p111
      %s113 = ssub.s32 %s16, %s23
      %p114 = scmp.eq.s32.totalorder %s113, 0
      %s116 = sadd.s32 %s115, 1
      %s117 = scalar_select %p114, %s115, %s116
      %p120 = pneg %p114
      %p121 = scmp.eq.s32.totalorder %s16, 1
      %p122 = por %p120, %p121
      %p123 = scmp.ne.s32.totalorder %s115, %s118
      %p124 = scmp.eq.s32.totalorder %s16, 0
      %p125 = por %p123, %p124
      %p126 = scmp.ne.s32.totalorder %s115, %s118
      %p127 = scmp.eq.s32.totalorder %s21, 1
      %p128 = por %p126, %p127
      %p129 = scmp.ne.s32.totalorder %s118, %s119
      %p130 = scmp.eq.s32.totalorder %s21, 0
      %p131 = por %p129, %p130
      %p132 = scmp.ne.s32.totalorder %s118, %s119
      %p133 = scmp.eq.s32.totalorder %s22, 1
      %p134 = por %p132, %p133
      %p136 = scmp.ne.s32.totalorder %s119, %s135
      %p137 = scmp.eq.s32.totalorder %s22, 0
      %p138 = por %p136, %p137
      %p139 = scmp.le.s32.totalorder 1, %s16
      %p140 = scmp.lt.s32.totalorder %s16, 3
      %p141 = pnand %p139, %p140
      %p142 = pneg %p141
      // Predicated region
      $region9: #{tpu_custom_call.1} parent=5 // pred_check
        _
      $region10: #{tpu_custom_call.1} parent=5 // pred_check_branch
        %144 = sbr.rel (%p141) target = $region12
      $region11: #{tpu_custom_call.1} parent=5 // pred_region
        %s145 = ssub.s32 %s16, 1
        // Predicated region
        $region13: #{tpu_custom_call.1} parent=11 // pred_check
          %p146 = pneg %p63
        $region14: #{tpu_custom_call.1} parent=11 // pred_check_branch
          %148 = sbr.rel (%p146) target = $region16
        $region15: #{tpu_custom_call.1} parent=11 // pred_region
          _
        $region16: #{tpu_custom_call.1} parent=11 // pred_fallthru
          _
        // Predicated region
        $region17: #{tpu_custom_call.1} parent=11 // pred_check
          %p149 = pneg %p84
        $region18: #{tpu_custom_call.1} parent=11 // pred_check_branch
          %151 = sbr.rel (%p149) target = $region20
        $region19: #{tpu_custom_call.1} parent=11 // pred_region
          _
        $region20: #{tpu_custom_call.1} parent=11 // pred_fallthru
          _
        // Predicated region
        $region21: #{tpu_custom_call.1} parent=11 // pred_check
          %p152 = pneg %p105
        $region22: #{tpu_custom_call.1} parent=11 // pred_check_branch
          %154 = sbr.rel (%p152) target = $region24
        $region23: #{tpu_custom_call.1} parent=11 // pred_region
          _
        $region24: #{tpu_custom_call.1} parent=11 // pred_fallthru
          _
      $region12: #{tpu_custom_call.1} parent=5 // pred_fallthru
        _
      %p155 = scmp.lt.s32.totalorder %s16, 2
      // Predicated region
      $region25: #{tpu_custom_call.1} parent=5 // pred_check
        %p156 = pneg %p155
      $region26: #{tpu_custom_call.1} parent=5 // pred_check_branch
        %158 = sbr.rel (%p156) target = $region28
      $region27: #{tpu_custom_call.1} parent=5 // pred_region
        // Predicated region
        $region29: #{tpu_custom_call.1} parent=27 // pred_check
          %p159 = pneg %p36
        $region30: #{tpu_custom_call.1} parent=27 // pred_check_branch
          %161 = sbr.rel (%p159) target = $region32
        $region31: #{tpu_custom_call.1} parent=27 // pred_region
          %s162 = sand.u32 %s26, 1
          %s163 = scalar_lea.sflag [#allocation3], %s162
          %s164 = sand.u32 %s26, 1
          %s165 = smul.addr %s164, 128
          %s166 = scalar_lea.vmem [#allocation2], %s165
          %s167 = smul.u32 4, %s16
          %s169 = ssub.s32 2048, 2048
          %170 = vsyncadd %s163, %s169
          %s171 = smul.addr %s167, 4
          %s172 = smul.addr %s171, 128
          %s173 = scalar_lea.hbm %s0, %s172
          %s174 = sshll.u32 %s166, 4
          %s175 = int_to_ptr.vmem [resolvable:$true] %s174
          %180 = dma.hbm_to_vmem [thread:$0]  %s173, 2048, %s175, %s163, 128, 128, 8
        $region32: #{tpu_custom_call.1} parent=27 // pred_fallthru
          _
      $region28: #{tpu_custom_call.1} parent=5 // pred_fallthru
        _
      %p181 = scmp.le.s32.totalorder 1, %s16
      %p182 = scmp.lt.s32.totalorder %s16, 3
      %p183 = pnand %p181, %p182
      %p184 = pneg %p183
      // Predicated region
      $region33: #{tpu_custom_call.1} parent=5 // pred_check
        _
      $region34: #{tpu_custom_call.1} parent=5 // pred_check_branch
        %186 = sbr.rel (%p183) target = $region36
      $region35: #{tpu_custom_call.1} parent=5 // pred_region
        %s187 = ssub.s32 %s16, 1
        %s188 = sand.u32 %s29, 1
        %s189 = scalar_lea.sflag [#allocation3], %s188
        %s190 = sand.u32 %s29, 1
        %s191 = smul.addr %s190, 128
        %s192 = scalar_lea.vmem [#allocation2], %s191
        // Predicated region
        $region37: #{tpu_custom_call.1} parent=35 // pred_check
          %p193 = pneg %p42
        $region38: #{tpu_custom_call.1} parent=35 // pred_check_branch
          %195 = sbr.rel (%p193) target = $region40
        $region39: #{tpu_custom_call.1} parent=35 // pred_region
          %196 = dma.done %s189, 2048
        $region40: #{tpu_custom_call.1} parent=35 // pred_fallthru
          _
        %s197 = sand.u32 %s29, 1
        %s198 = scalar_lea.sflag [#allocation3], %s197
        %s199 = sand.u32 %s29, 1
        %s200 = smul.addr %s199, 128
        %s201 = scalar_lea.vmem [#allocation2], %s200
        %p202 = pneg %p42
        %p203 = pneg %p39
        %p204 = pneg %p63
        %p205 = pneg %p60
        %p206 = pneg %p84
        %p207 = pneg %p81
        %p208 = pneg %p105
        %p209 = pneg %p102
        %p210 = pneg %p131
        %p211 = pneg %p128
        %s212 = sand.u32 %s118, 1
        %s213 = scalar_lea.sflag [#allocation4], %s212
        %s214 = sand.u32 %s118, 1
        %s215 = smul.addr %s214, 128
        %s216 = scalar_lea.vmem [#allocation5], %s215
        %s217 = smul.u32 4, %s21
        %s218 = smul.u32 4, %s21
        %v219 = vld [vmem:[%s192] sm:$0xff]
        %v220 = vld [vmem:[%s192 + $0x8] sm:$0xff]
        %v221 = vld [vmem:[%s192 + $0x10] sm:$0xff]
        %v222 = vld [vmem:[%s192 + $0x18] sm:$0xff]
        %v223 = vld [vmem:[%s192 + $0x20] sm:$0xff]
        %v224 = vld [vmem:[%s192 + $0x28] sm:$0xff]
        %v225 = vld [vmem:[%s192 + $0x30] sm:$0xff]
        %v226 = vld [vmem:[%s192 + $0x38] sm:$0xff]
        %v227 = vld [vmem:[%s192 + $0x40] sm:$0xff]
        %v228 = vld [vmem:[%s192 + $0x48] sm:$0xff]
        %v229 = vld [vmem:[%s192 + $0x50] sm:$0xff]
        %v230 = vld [vmem:[%s192 + $0x58] sm:$0xff]
        %v231 = vld [vmem:[%s192 + $0x60] sm:$0xff]
        %v232 = vld [vmem:[%s192 + $0x68] sm:$0xff]
        %v233 = vld [vmem:[%s192 + $0x70] sm:$0xff]
        %v234 = vld [vmem:[%s192 + $0x78] sm:$0xff]
        %v235 = vld [vmem:[%s1] sm:$0xff]
        %v236 = vld [vmem:[%s1 + $0x8] sm:$0xff]
        %v237 = vld [vmem:[%s1 + $0x10] sm:$0xff]
        %v238 = vld [vmem:[%s1 + $0x18] sm:$0xff]
        %v239 = vld [vmem:[%s1 + $0x20] sm:$0xff]
        %v240 = vld [vmem:[%s1 + $0x28] sm:$0xff]
        %v241 = vld [vmem:[%s1 + $0x30] sm:$0xff]
        %v242 = vld [vmem:[%s1 + $0x38] sm:$0xff]
        %v243 = vld [vmem:[%s1 + $0x40] sm:$0xff]
        %v244 = vld [vmem:[%s1 + $0x48] sm:$0xff]
        %v245 = vld [vmem:[%s1 + $0x50] sm:$0xff]
        %v246 = vld [vmem:[%s1 + $0x58] sm:$0xff]
        %v247 = vld [vmem:[%s2] sm:$0xff]
        %v248 = vld [vmem:[%s2 + $0x8] sm:$0xff]
        %v249 = vld [vmem:[%s2 + $0x10] sm:$0xff]
        %v250 = vld [vmem:[%s2 + $0x18] sm:$0xff]
        %v251 = vld [vmem:[%s2 + $0x20] sm:$0xff]
        %v252 = vld [vmem:[%s2 + $0x28] sm:$0xff]
        %v253 = vld [vmem:[%s2 + $0x30] sm:$0xff]
        %v254 = vld [vmem:[%s2 + $0x38] sm:$0xff]
        %v255 = vld [vmem:[%s2 + $0x40] sm:$0xff]
        %v256 = vld [vmem:[%s2 + $0x48] sm:$0xff]
        %v257 = vld [vmem:[%s2 + $0x50] sm:$0xff]
        %v258 = vld [vmem:[%s2 + $0x58] sm:$0xff]
        %260 = vset.pattern.permute.xlu0 0
        %261 = vperm.xlu0 %260, %v247
        %v262 = vpop.permute.xlu0 %261
        %265 = vset.pattern.permute.xlu0 0
        %266 = vperm.xlu0 %265, %v248
        %v267 = vpop.permute.xlu0 %266
        %270 = vset.pattern.permute.xlu0 0
        %271 = vperm.xlu0 %270, %v249
        %v272 = vpop.permute.xlu0 %271
        %275 = vset.pattern.permute.xlu0 0
        %276 = vperm.xlu0 %275, %v250
        %v277 = vpop.permute.xlu0 %276
        %280 = vset.pattern.permute.xlu0 0
        %281 = vperm.xlu0 %280, %v251
        %v282 = vpop.permute.xlu0 %281
        %285 = vset.pattern.permute.xlu0 0
        %286 = vperm.xlu0 %285, %v252
        %v287 = vpop.permute.xlu0 %286
        %290 = vset.pattern.permute.xlu0 0
        %291 = vperm.xlu0 %290, %v253
        %v292 = vpop.permute.xlu0 %291
        %295 = vset.pattern.permute.xlu0 0
        %296 = vperm.xlu0 %295, %v254
        %v297 = vpop.permute.xlu0 %296
        %300 = vset.pattern.permute.xlu0 0
        %301 = vperm.xlu0 %300, %v255
        %v302 = vpop.permute.xlu0 %301
        %305 = vset.pattern.permute.xlu0 0
        %306 = vperm.xlu0 %305, %v256
        %v307 = vpop.permute.xlu0 %306
        %310 = vset.pattern.permute.xlu0 0
        %311 = vperm.xlu0 %310, %v257
        %v312 = vpop.permute.xlu0 %311
        %315 = vset.pattern.permute.xlu0 0
        %316 = vperm.xlu0 %315, %v258
        %v317 = vpop.permute.xlu0 %316
        %vm319 = vcmask 261120
        %v321 = vsel %vm319, %v235, 0
        %v324 = vsel %vm319, %v236, 0
        %v327 = vsel %vm319, %v237, 0
        %v330 = vsel %vm319, %v238, 0
        %v333 = vsel %vm319, %v239, 0
        %v336 = vsel %vm319, %v240, 0
        %v339 = vsel %vm319, %v241, 0
        %v342 = vsel %vm319, %v242, 0
        %v345 = vsel %vm319, %v243, 0
        %v348 = vsel %vm319, %v244, 0
        %v351 = vsel %vm319, %v245, 0
        %v354 = vsel %vm319, %v246, 0
        %356 = vmatprep.subr.mxu0 0.0
        %357 = vmatpush1.msra.mxu0 %v219
        %358 = vmatprep.subr.mxu0 0.0
        %359 = vmatpush1.msra.mxu0 %v220
        %360 = vmatprep.subr.mxu0 0.0
        %361 = vmatpush1.msra.mxu0 %v221
        %362 = vmatprep.subr.mxu0 0.0
        %363 = vmatpush1.msra.mxu0 %v222
        %364 = vmatprep.subr.mxu0 0.0
        %365 = vmatpush1.msra.mxu0 0.0
        %366 = vmatprep.subr.mxu0 0.0
        %367 = vmatpush1.msra.mxu0 0.0
        %368 = vmatprep.subr.mxu0 0.0
        %369 = vmatpush1.msra.mxu0 0.0
        %370 = vmatprep.subr.mxu0 0.0
        %371 = vmatpush1.msra.mxu0 0.0
        %372 = vmatprep.subr.mxu0 0.0
        %373 = vmatpush1.msra.mxu0 0.0
        %374 = vmatprep.subr.mxu0 0.0
        %375 = vmatpush1.msra.mxu0 0.0
        %376 = vmatprep.subr.mxu0 0.0
        %377 = vmatpush1.msra.mxu0 0.0
        %378 = vmatprep.subr.mxu0 0.0
        %379 = vmatpush1.msra.mxu0 0.0
        %380 = vmatprep.subr.mxu0 0.0
        %381 = vmatpush1.msra.mxu0 0.0
        %382 = vmatprep.subr.mxu0 0.0
        %383 = vmatpush1.msra.mxu0 0.0
        %384 = vmatprep.subr.mxu0 0.0
        %385 = vmatpush1.msra.mxu0 0.0
        %386 = vmatprep.subr.mxu0 0.0
        %387 = vmatpush1.msra.mxu0 0.0
        %388 = vmatprep.subr.mxu0 0.0
        %389 = vmatpush1.msra.mxu0 0.0
        %390 = vmatprep.subr.mxu0 0.0
        %391 = vmatpush1.msra.mxu0 0.0
        %392 = vmatprep.subr.mxu0 0.0
        %393 = vmatpush1.msra.mxu0 0.0
        %394 = vmatprep.subr.mxu0 0.0
        %395 = vmatpush1.msra.mxu0 0.0
        %396 = vmatprep.subr.mxu0 0.0
        %397 = vmatpush1.msra.mxu0 0.0
        %398 = vmatprep.subr.mxu0 0.0
        %399 = vmatpush1.msra.mxu0 0.0
        %400 = vmatprep.subr.mxu0 0.0
        %401 = vmatpush1.msra.mxu0 0.0
        %402 = vmatprep.subr.mxu0 0.0
        %403 = vmatpush1.msra.mxu0 0.0
        %404 = vmatprep.subr.mxu0 0.0
        %405 = vmatpush1.msra.mxu0 0.0
        %406 = vmatprep.subr.mxu0 0.0
        %407 = vmatpush1.msra.mxu0 0.0
        %408 = vmatprep.subr.mxu0 0.0
        %409 = vmatpush1.msra.mxu0 0.0
        %410 = vmatprep.subr.mxu0 0.0
        %411 = vmatpush1.msra.mxu0 0.0
        %412 = vmatprep.subr.mxu0 0.0
        %413 = vmatpush1.msra.mxu0 0.0
        %414 = vmatprep.subr.mxu0 0.0
        %415 = vmatpush1.msra.mxu0 0.0
        %416 = vmatprep.subr.mxu0 0.0
        %417 = vmatpush1.msra.mxu0 0.0
        %418 = vmatprep.subr.mxu0 0.0
        %419 = vmatpush1.msra.mxu0 0.0
        %420 = vmatprep.mubr.f32.mxu0 0.0
        %421 = vmatmul.mubr.f32.gmra.mrb[0].mxu0 %v321
        %v422 = vpop.f32.mrb[0].mxu0
        %v423 = vadd.f32 %v262, %v422
        %v424 = vpop.f32.mrb[0].mxu0
        %425 = vmatprep.mubr.f32.mxu0 0.0
        %426 = vmatmul.mubr.f32.gmra.mrb[0].mxu0 %v324
        %v427 = vpop.f32.mrb[0].mxu0
        %v428 = vadd.f32 %v267, %v427
        %v429 = vpop.f32.mrb[0].mxu0
        %430 = vmatprep.mubr.f32.mxu0 0.0
        %431 = vmatmul.mubr.f32.gmra.mrb[0].mxu0 %v327
        %v432 = vpop.f32.mrb[0].mxu0
        %v433 = vadd.f32 %v272, %v432
        %v434 = vpop.f32.mrb[0].mxu0
        %435 = vmatprep.mubr.f32.mxu0 0.0
        %436 = vmatmul.mubr.f32.gmra.mrb[0].mxu0 %v330
        %v437 = vpop.f32.mrb[0].mxu0
        %v438 = vadd.f32 %v277, %v437
        %v439 = vpop.f32.mrb[0].mxu0
        %440 = vmatprep.mubr.f32.mxu0 0.0
        %441 = vmatmul.mubr.f32.gmra.mrb[0].mxu0 %v333
        %v442 = vpop.f32.mrb[0].mxu0
        %v443 = vadd.f32 %v282, %v442
        %v444 = vpop.f32.mrb[0].mxu0
        %445 = vmatprep.mubr.f32.mxu0 0.0
        %446 = vmatmul.mubr.f32.gmra.mrb[0].mxu0 %v336
        %v447 = vpop.f32.mrb[0].mxu0
        %v448 = vadd.f32 %v287, %v447
        %v449 = vpop.f32.mrb[0].mxu0
        %450 = vmatprep.mubr.f32.mxu0 0.0
        %451 = vmatmul.mubr.f32.gmra.mrb[0].mxu0 %v339
        %v452 = vpop.f32.mrb[0].mxu0
        %v453 = vadd.f32 %v292, %v452
        %v454 = vpop.f32.mrb[0].mxu0
        %455 = vmatprep.mubr.f32.mxu0 0.0
        %456 = vmatmul.mubr.f32.gmra.mrb[0].mxu0 %v342
        %v457 = vpop.f32.mrb[0].mxu0
        %v458 = vadd.f32 %v297, %v457
        %v459 = vpop.f32.mrb[0].mxu0
        %460 = vmatprep.mubr.f32.mxu0 0.0
        %461 = vmatmul.mubr.f32.gmra.mrb[0].mxu0 %v345
        %v462 = vpop.f32.mrb[0].mxu0
        %v463 = vadd.f32 %v302, %v462
        %v464 = vpop.f32.mrb[0].mxu0
        %465 = vmatprep.mubr.f32.mxu0 0.0
        %466 = vmatmul.mubr.f32.gmra.mrb[0].mxu0 %v348
        %v467 = vpop.f32.mrb[0].mxu0
        %v468 = vadd.f32 %v307, %v467
        %v469 = vpop.f32.mrb[0].mxu0
        %470 = vmatprep.mubr.f32.mxu0 0.0
        %471 = vmatmul.mubr.f32.gmra.mrb[0].mxu0 %v351
        %v472 = vpop.f32.mrb[0].mxu0
        %v473 = vadd.f32 %v312, %v472
        %v474 = vpop.f32.mrb[0].mxu0
        %475 = vmatprep.mubr.f32.mxu0 0.0
        %476 = vmatmul.mubr.f32.gmra.mrb[0].mxu0 %v354
        %v477 = vpop.f32.mrb[0].mxu0
        %v478 = vadd.f32 %v317, %v477
        %v479 = vpop.f32.mrb[0].mxu0
        %480 = vdwg.mxu0
        %481 = vmatprep.subr.mxu0 0.0
        %482 = vmatpush1.msra.mxu0 %v223
        %483 = vmatprep.subr.mxu0 0.0
        %484 = vmatpush1.msra.mxu0 %v224
        %485 = vmatprep.subr.mxu0 0.0
        %486 = vmatpush1.msra.mxu0 %v225
        %487 = vmatprep.subr.mxu0 0.0
        %488 = vmatpush1.msra.mxu0 %v226
        %489 = vmatprep.subr.mxu0 0.0
        %490 = vmatpush1.msra.mxu0 0.0
        %491 = vmatprep.subr.mxu0 0.0
        %492 = vmatpush1.msra.mxu0 0.0
        %493 = vmatprep.subr.mxu0 0.0
        %494 = vmatpush1.msra.mxu0 0.0
        %495 = vmatprep.subr.mxu0 0.0
        %496 = vmatpush1.msra.mxu0 0.0
        %497 = vmatprep.subr.mxu0 0.0
        %498 = vmatpush1.msra.mxu0 0.0
        %499 = vmatprep.subr.mxu0 0.0
        %500 = vmatpush1.msra.mxu0 0.0
        %501 = vmatprep.subr.mxu0 0.0
        %502 = vmatpush1.msra.mxu0 0.0
        %503 = vmatprep.subr.mxu0 0.0
        %504 = vmatpush1.msra.mxu0 0.0
        %505 = vmatprep.subr.mxu0 0.0
        %506 = vmatpush1.msra.mxu0 0.0
        %507 = vmatprep.subr.mxu0 0.0
        %508 = vmatpush1.msra.mxu0 0.0
        %509 = vmatprep.subr.mxu0 0.0
        %510 = vmatpush1.msra.mxu0 0.0
        %511 = vmatprep.subr.mxu0 0.0
        %512 = vmatpush1.msra.mxu0 0.0
        %513 = vmatprep.subr.mxu0 0.0
        %514 = vmatpush1.msra.mxu0 0.0
        %515 = vmatprep.subr.mxu0 0.0
        %516 = vmatpush1.msra.mxu0 0.0
        %517 = vmatprep.subr.mxu0 0.0
        %518 = vmatpush1.msra.mxu0 0.0
        %519 = vmatprep.subr.mxu0 0.0
        %520 = vmatpush1.msra.mxu0 0.0
        %521 = vmatprep.subr.mxu0 0.0
        %522 = vmatpush1.msra.mxu0 0.0
        %523 = vmatprep.subr.mxu0 0.0
        %524 = vmatpush1.msra.mxu0 0.0
        %525 = vmatprep.subr.mxu0 0.0
        %526 = vmatpush1.msra.mxu0 0.0
        %527 = vmatprep.subr.mxu0 0.0
        %528 = vmatpush1.msra.mxu0 0.0
        %529 = vmatprep.subr.mxu0 0.0
        %530 = vmatpush1.msra.mxu0 0.0
        %531 = vmatprep.subr.mxu0 0.0
        %532 = vmatpush1.msra.mxu0 0.0
        %533 = vmatprep.subr.mxu0 0.0
        %534 = vmatpush1.msra.mxu0 0.0
        %535 = vmatprep.subr.mxu0 0.0
        %536 = vmatpush1.msra.mxu0 0.0
        %537 = vmatprep.subr.mxu0 0.0
        %538 = vmatpush1.msra.mxu0 0.0
        %539 = vmatprep.subr.mxu0 0.0
        %540 = vmatpush1.msra.mxu0 0.0
        %541 = vmatprep.subr.mxu0 0.0
        %542 = vmatpush1.msra.mxu0 0.0
        %543 = vmatprep.subr.mxu0 0.0
        %544 = vmatpush1.msra.mxu0 0.0
        %545 = vmatprep.mubr.f32.mxu0 0.0
        %546 = vmatmul.mubr.f32.gmra.mrb[0].mxu0 %v321
        %v547 = vpop.f32.mrb[0].mxu0
        %v548 = vadd.f32 %v262, %v547
        %v549 = vpop.f32.mrb[0].mxu0
        %550 = vmatprep.mubr.f32.mxu0 0.0
        %551 = vmatmul.mubr.f32.gmra.mrb[0].mxu0 %v324
        %v552 = vpop.f32.mrb[0].mxu0
        %v553 = vadd.f32 %v267, %v552
        %v554 = vpop.f32.mrb[0].mxu0
        %555 = vmatprep.mubr.f32.mxu0 0.0
        %556 = vmatmul.mubr.f32.gmra.mrb[0].mxu0 %v327
        %v557 = vpop.f32.mrb[0].mxu0
        %v558 = vadd.f32 %v272, %v557
        %v559 = vpop.f32.mrb[0].mxu0
        %560 = vmatprep.mubr.f32.mxu0 0.0
        %561 = vmatmul.mubr.f32.gmra.mrb[0].mxu0 %v330
        %v562 = vpop.f32.mrb[0].mxu0
        %v563 = vadd.f32 %v277, %v562
        %v564 = vpop.f32.mrb[0].mxu0
        %565 = vmatprep.mubr.f32.mxu0 0.0
        %566 = vmatmul.mubr.f32.gmra.mrb[0].mxu0 %v333
        %v567 = vpop.f32.mrb[0].mxu0
        %v568 = vadd.f32 %v282, %v567
        %v569 = vpop.f32.mrb[0].mxu0
        %570 = vmatprep.mubr.f32.mxu0 0.0
        %571 = vmatmul.mubr.f32.gmra.mrb[0].mxu0 %v336
        %v572 = vpop.f32.mrb[0].mxu0
        %v573 = vadd.f32 %v287, %v572
        %v574 = vpop.f32.mrb[0].mxu0
        %575 = vmatprep.mubr.f32.mxu0 0.0
        %576 = vmatmul.mubr.f32.gmra.mrb[0].mxu0 %v339
        %v577 = vpop.f32.mrb[0].mxu0
        %v578 = vadd.f32 %v292, %v577
        %v579 = vpop.f32.mrb[0].mxu0
        %580 = vmatprep.mubr.f32.mxu0 0.0
        %581 = vmatmul.mubr.f32.gmra.mrb[0].mxu0 %v342
        %v582 = vpop.f32.mrb[0].mxu0
        %v583 = vadd.f32 %v297, %v582
        %v584 = vpop.f32.mrb[0].mxu0
        %585 = vmatprep.mubr.f32.mxu0 0.0
        %586 = vmatmul.mubr.f32.gmra.mrb[0].mxu0 %v345
        %v587 = vpop.f32.mrb[0].mxu0
        %v588 = vadd.f32 %v302, %v587
        %v589 = vpop.f32.mrb[0].mxu0
        %590 = vmatprep.mubr.f32.mxu0 0.0
        %591 = vmatmul.mubr.f32.gmra.mrb[0].mxu0 %v348
        %v592 = vpop.f32.mrb[0].mxu0
        %v593 = vadd.f32 %v307, %v592
        %v594 = vpop.f32.mrb[0].mxu0
        %595 = vmatprep.mubr.f32.mxu0 0.0
        %596 = vmatmul.mubr.f32.gmra.mrb[0].mxu0 %v351
        %v597 = vpop.f32.mrb[0].mxu0
        %v598 = vadd.f32 %v312, %v597
        %v599 = vpop.f32.mrb[0].mxu0
        %600 = vmatprep.mubr.f32.mxu0 0.0
        %601 = vmatmul.mubr.f32.gmra.mrb[0].mxu0 %v354
        %v602 = vpop.f32.mrb[0].mxu0
        %v603 = vadd.f32 %v317, %v602
        %v604 = vpop.f32.mrb[0].mxu0
        %605 = vdwg.mxu0
        %606 = vmatprep.subr.mxu0 0.0
        %607 = vmatpush1.msra.mxu0 %v227
        %608 = vmatprep.subr.mxu0 0.0
        %609 = vmatpush1.msra.mxu0 %v228
        %610 = vmatprep.subr.mxu0 0.0
        %611 = vmatpush1.msra.mxu0 %v229
        %612 = vmatprep.subr.mxu0 0.0
        %613 = vmatpush1.msra.mxu0 %v230
        %614 = vmatprep.subr.mxu0 0.0
        %615 = vmatpush1.msra.mxu0 0.0
        %616 = vmatprep.subr.mxu0 0.0
        %617 = vmatpush1.msra.mxu0 0.0
        %618 = vmatprep.subr.mxu0 0.0
        %619 = vmatpush1.msra.mxu0 0.0
        %620 = vmatprep.subr.mxu0 0.0
        %621 = vmatpush1.msra.mxu0 0.0
        %622 = vmatprep.subr.mxu0 0.0
        %623 = vmatpush1.msra.mxu0 0.0
        %624 = vmatprep.subr.mxu0 0.0
        %625 = vmatpush1.msra.mxu0 0.0
        %626 = vmatprep.subr.mxu0 0.0
        %627 = vmatpush1.msra.mxu0 0.0
        %628 = vmatprep.subr.mxu0 0.0
        %629 = vmatpush1.msra.mxu0 0.0
        %630 = vmatprep.subr.mxu0 0.0
        %631 = vmatpush1.msra.mxu0 0.0
        %632 = vmatprep.subr.mxu0 0.0
        %633 = vmatpush1.msra.mxu0 0.0
        %634 = vmatprep.subr.mxu0 0.0
        %635 = vmatpush1.msra.mxu0 0.0
        %636 = vmatprep.subr.mxu0 0.0
        %637 = vmatpush1.msra.mxu0 0.0
        %638 = vmatprep.subr.mxu0 0.0
        %639 = vmatpush1.msra.mxu0 0.0
        %640 = vmatprep.subr.mxu0 0.0
        %641 = vmatpush1.msra.mxu0 0.0
        %642 = vmatprep.subr.mxu0 0.0
        %643 = vmatpush1.msra.mxu0 0.0
        %644 = vmatprep.subr.mxu0 0.0
        %645 = vmatpush1.msra.mxu0 0.0
        %646 = vmatprep.subr.mxu0 0.0
        %647 = vmatpush1.msra.mxu0 0.0
        %648 = vmatprep.subr.mxu0 0.0
        %649 = vmatpush1.msra.mxu0 0.0
        %650 = vmatprep.subr.mxu0 0.0
        %651 = vmatpush1.msra.mxu0 0.0
        %652 = vmatprep.subr.mxu0 0.0
        %653 = vmatpush1.msra.mxu0 0.0
        %654 = vmatprep.subr.mxu0 0.0
        %655 = vmatpush1.msra.mxu0 0.0
        %656 = vmatprep.subr.mxu0 0.0
        %657 = vmatpush1.msra.mxu0 0.0
        %658 = vmatprep.subr.mxu0 0.0
        %659 = vmatpush1.msra.mxu0 0.0
        %660 = vmatprep.subr.mxu0 0.0
        %661 = vmatpush1.msra.mxu0 0.0
        %662 = vmatprep.subr.mxu0 0.0
        %663 = vmatpush1.msra.mxu0 0.0
        %664 = vmatprep.subr.mxu0 0.0
        %665 = vmatpush1.msra.mxu0 0.0
        %666 = vmatprep.subr.mxu0 0.0
        %667 = vmatpush1.msra.mxu0 0.0
        %668 = vmatprep.subr.mxu0 0.0
        %669 = vmatpush1.msra.mxu0 0.0
        %670 = vmatprep.mubr.f32.mxu0 0.0
        %671 = vmatmul.mubr.f32.gmra.mrb[0].mxu0 %v321
        %v672 = vpop.f32.mrb[0].mxu0
        %v673 = vadd.f32 %v262, %v672
        %v674 = vpop.f32.mrb[0].mxu0
        %675 = vmatprep.mubr.f32.mxu0 0.0
        %676 = vmatmul.mubr.f32.gmra.mrb[0].mxu0 %v324
        %v677 = vpop.f32.mrb[0].mxu0
        %v678 = vadd.f32 %v267, %v677
        %v679 = vpop.f32.mrb[0].mxu0
        %680 = vmatprep.mubr.f32.mxu0 0.0
        %681 = vmatmul.mubr.f32.gmra.mrb[0].mxu0 %v327
        %v682 = vpop.f32.mrb[0].mxu0
        %v683 = vadd.f32 %v272, %v682
        %v684 = vpop.f32.mrb[0].mxu0
        %685 = vmatprep.mubr.f32.mxu0 0.0
        %686 = vmatmul.mubr.f32.gmra.mrb[0].mxu0 %v330
        %v687 = vpop.f32.mrb[0].mxu0
        %v688 = vadd.f32 %v277, %v687
        %v689 = vpop.f32.mrb[0].mxu0
        %690 = vmatprep.mubr.f32.mxu0 0.0
        %691 = vmatmul.mubr.f32.gmra.mrb[0].mxu0 %v333
        %v692 = vpop.f32.mrb[0].mxu0
        %v693 = vadd.f32 %v282, %v692
        %v694 = vpop.f32.mrb[0].mxu0
        %695 = vmatprep.mubr.f32.mxu0 0.0
        %696 = vmatmul.mubr.f32.gmra.mrb[0].mxu0 %v336
        %v697 = vpop.f32.mrb[0].mxu0
        %v698 = vadd.f32 %v287, %v697
        %v699 = vpop.f32.mrb[0].mxu0
        %700 = vmatprep.mubr.f32.mxu0 0.0
        %701 = vmatmul.mubr.f32.gmra.mrb[0].mxu0 %v339
        %v702 = vpop.f32.mrb[0].mxu0
        %v703 = vadd.f32 %v292, %v702
        %v704 = vpop.f32.mrb[0].mxu0
        %705 = vmatprep.mubr.f32.mxu0 0.0
        %706 = vmatmul.mubr.f32.gmra.mrb[0].mxu0 %v342
        %v707 = vpop.f32.mrb[0].mxu0
        %v708 = vadd.f32 %v297, %v707
        %v709 = vpop.f32.mrb[0].mxu0
        %710 = vmatprep.mubr.f32.mxu0 0.0
        %711 = vmatmul.mubr.f32.gmra.mrb[0].mxu0 %v345
        %v712 = vpop.f32.mrb[0].mxu0
        %v713 = vadd.f32 %v302, %v712
        %v714 = vpop.f32.mrb[0].mxu0
        %715 = vmatprep.mubr.f32.mxu0 0.0
        %716 = vmatmul.mubr.f32.gmra.mrb[0].mxu0 %v348
        %v717 = vpop.f32.mrb[0].mxu0
        %v718 = vadd.f32 %v307, %v717
        %v719 = vpop.f32.mrb[0].mxu0
        %720 = vmatprep.mubr.f32.mxu0 0.0
        %721 = vmatmul.mubr.f32.gmra.mrb[0].mxu0 %v351
        %v722 = vpop.f32.mrb[0].mxu0
        %v723 = vadd.f32 %v312, %v722
        %v724 = vpop.f32.mrb[0].mxu0
        %725 = vmatprep.mubr.f32.mxu0 0.0
        %726 = vmatmul.mubr.f32.gmra.mrb[0].mxu0 %v354
        %v727 = vpop.f32.mrb[0].mxu0
        %v728 = vadd.f32 %v317, %v727
        %v729 = vpop.f32.mrb[0].mxu0
        %730 = vdwg.mxu0
        %731 = vmatprep.subr.mxu0 0.0
        %732 = vmatpush1.msra.mxu0 %v231
        %733 = vmatprep.subr.mxu0 0.0
        %734 = vmatpush1.msra.mxu0 %v232
        %735 = vmatprep.subr.mxu0 0.0
        %736 = vmatpush1.msra.mxu0 %v233
        %737 = vmatprep.subr.mxu0 0.0
        %738 = vmatpush1.msra.mxu0 %v234
        %739 = vmatprep.subr.mxu0 0.0
        %740 = vmatpush1.msra.mxu0 0.0
        %741 = vmatprep.subr.mxu0 0.0
        %742 = vmatpush1.msra.mxu0 0.0
        %743 = vmatprep.subr.mxu0 0.0
        %744 = vmatpush1.msra.mxu0 0.0
        %745 = vmatprep.subr.mxu0 0.0
        %746 = vmatpush1.msra.mxu0 0.0
        %747 = vmatprep.subr.mxu0 0.0
        %748 = vmatpush1.msra.mxu0 0.0
        %749 = vmatprep.subr.mxu0 0.0
        %750 = vmatpush1.msra.mxu0 0.0
        %751 = vmatprep.subr.mxu0 0.0
        %752 = vmatpush1.msra.mxu0 0.0
        %753 = vmatprep.subr.mxu0 0.0
        %754 = vmatpush1.msra.mxu0 0.0
        %755 = vmatprep.subr.mxu0 0.0
        %756 = vmatpush1.msra.mxu0 0.0
        %757 = vmatprep.subr.mxu0 0.0
        %758 = vmatpush1.msra.mxu0 0.0
        %759 = vmatprep.subr.mxu0 0.0
        %760 = vmatpush1.msra.mxu0 0.0
        %761 = vmatprep.subr.mxu0 0.0
        %762 = vmatpush1.msra.mxu0 0.0
        %763 = vmatprep.subr.mxu0 0.0
        %764 = vmatpush1.msra.mxu0 0.0
        %765 = vmatprep.subr.mxu0 0.0
        %766 = vmatpush1.msra.mxu0 0.0
        %767 = vmatprep.subr.mxu0 0.0
        %768 = vmatpush1.msra.mxu0 0.0
        %769 = vmatprep.subr.mxu0 0.0
        %770 = vmatpush1.msra.mxu0 0.0
        %771 = vmatprep.subr.mxu0 0.0
        %772 = vmatpush1.msra.mxu0 0.0
        %773 = vmatprep.subr.mxu0 0.0
        %774 = vmatpush1.msra.mxu0 0.0
        %775 = vmatprep.subr.mxu0 0.0
        %776 = vmatpush1.msra.mxu0 0.0
        %777 = vmatprep.subr.mxu0 0.0
        %778 = vmatpush1.msra.mxu0 0.0
        %779 = vmatprep.subr.mxu0 0.0
        %780 = vmatpush1.msra.mxu0 0.0
        %781 = vmatprep.subr.mxu0 0.0
        %782 = vmatpush1.msra.mxu0 0.0
        %783 = vmatprep.subr.mxu0 0.0
        %784 = vmatpush1.msra.mxu0 0.0
        %785 = vmatprep.subr.mxu0 0.0
        %786 = vmatpush1.msra.mxu0 0.0
        %787 = vmatprep.subr.mxu0 0.0
        %788 = vmatpush1.msra.mxu0 0.0
        %789 = vmatprep.subr.mxu0 0.0
        %790 = vmatpush1.msra.mxu0 0.0
        %791 = vmatprep.subr.mxu0 0.0
        %792 = vmatpush1.msra.mxu0 0.0
        %793 = vmatprep.subr.mxu0 0.0
        %794 = vmatpush1.msra.mxu0 0.0
        %795 = vmatprep.mubr.f32.mxu0 0.0
        %796 = vmatmul.mubr.f32.gmra.mrb[0].mxu0 %v321
        %v797 = vpop.f32.mrb[0].mxu0
        %v798 = vadd.f32 %v262, %v797
        %v799 = vpop.f32.mrb[0].mxu0
        %800 = vmatprep.mubr.f32.mxu0 0.0
        %801 = vmatmul.mubr.f32.gmra.mrb[0].mxu0 %v324
        %v802 = vpop.f32.mrb[0].mxu0
        %v803 = vadd.f32 %v267, %v802
        %v804 = vpop.f32.mrb[0].mxu0
        %805 = vmatprep.mubr.f32.mxu0 0.0
        %806 = vmatmul.mubr.f32.gmra.mrb[0].mxu0 %v327
        %v807 = vpop.f32.mrb[0].mxu0
        %v808 = vadd.f32 %v272, %v807
        %v809 = vpop.f32.mrb[0].mxu0
        %810 = vmatprep.mubr.f32.mxu0 0.0
        %811 = vmatmul.mubr.f32.gmra.mrb[0].mxu0 %v330
        %v812 = vpop.f32.mrb[0].mxu0
        %v813 = vadd.f32 %v277, %v812
        %v814 = vpop.f32.mrb[0].mxu0
        %815 = vmatprep.mubr.f32.mxu0 0.0
        %816 = vmatmul.mubr.f32.gmra.mrb[0].mxu0 %v333
        %v817 = vpop.f32.mrb[0].mxu0
        %v818 = vadd.f32 %v282, %v817
        %v819 = vpop.f32.mrb[0].mxu0
        %820 = vmatprep.mubr.f32.mxu0 0.0
        %821 = vmatmul.mubr.f32.gmra.mrb[0].mxu0 %v336
        %v822 = vpop.f32.mrb[0].mxu0
        %v823 = vadd.f32 %v287, %v822
        %v824 = vpop.f32.mrb[0].mxu0
        %825 = vmatprep.mubr.f32.mxu0 0.0
        %826 = vmatmul.mubr.f32.gmra.mrb[0].mxu0 %v339
        %v827 = vpop.f32.mrb[0].mxu0
        %v828 = vadd.f32 %v292, %v827
        %v829 = vpop.f32.mrb[0].mxu0
        %830 = vmatprep.mubr.f32.mxu0 0.0
        %831 = vmatmul.mubr.f32.gmra.mrb[0].mxu0 %v342
        %v832 = vpop.f32.mrb[0].mxu0
        %v833 = vadd.f32 %v297, %v832
        %v834 = vpop.f32.mrb[0].mxu0
        %835 = vmatprep.mubr.f32.mxu0 0.0
        %836 = vmatmul.mubr.f32.gmra.mrb[0].mxu0 %v345
        %v837 = vpop.f32.mrb[0].mxu0
        %v838 = vadd.f32 %v302, %v837
        %v839 = vpop.f32.mrb[0].mxu0
        %840 = vmatprep.mubr.f32.mxu0 0.0
        %841 = vmatmul.mubr.f32.gmra.mrb[0].mxu0 %v348
        %v842 = vpop.f32.mrb[0].mxu0
        %v843 = vadd.f32 %v307, %v842
        %v844 = vpop.f32.mrb[0].mxu0
        %845 = vmatprep.mubr.f32.mxu0 0.0
        %846 = vmatmul.mubr.f32.gmra.mrb[0].mxu0 %v351
        %v847 = vpop.f32.mrb[0].mxu0
        %v848 = vadd.f32 %v312, %v847
        %v849 = vpop.f32.mrb[0].mxu0
        %850 = vmatprep.mubr.f32.mxu0 0.0
        %851 = vmatmul.mubr.f32.gmra.mrb[0].mxu0 %v354
        %v852 = vpop.f32.mrb[0].mxu0
        %v853 = vadd.f32 %v317, %v852
        %v854 = vpop.f32.mrb[0].mxu0
        %855 = vdwg.mxu0
        %v856 = vld [vmem:[%s3] sm:$0x1f]
        %857 = vmatprep.subr.mxu0 0.0
        %858 = vmatpush1.xpose.msra.mxu0 %v443
        %859 = vmatprep.subr.mxu0 0.0
        %860 = vmatpush1.xpose.msra.mxu0 %v448
        %861 = vmatprep.subr.mxu0 0.0
        %862 = vmatpush1.xpose.msra.mxu0 %v453
        %863 = vmatprep.subr.mxu0 0.0
        %864 = vmatpush1.xpose.msra.mxu0 %v458
        %865 = vmatprep.subr.mxu0 0.0
        %866 = vmatpush1.xpose.msra.mxu0 0.0
        %867 = vmatprep.subr.mxu0 0.0
        %868 = vmatpush1.xpose.msra.mxu0 0.0
        %869 = vmatprep.subr.mxu0 0.0
        %870 = vmatpush1.xpose.msra.mxu0 0.0
        %871 = vmatprep.subr.mxu0 0.0
        %872 = vmatpush1.xpose.msra.mxu0 0.0
        %873 = vmatprep.subr.mxu0 0.0
        %874 = vmatpush1.xpose.msra.mxu0 0.0
        %875 = vmatprep.subr.mxu0 0.0
        %876 = vmatpush1.xpose.msra.mxu0 0.0
        %877 = vmatprep.subr.mxu0 0.0
        %878 = vmatpush1.xpose.msra.mxu0 0.0
        %879 = vmatprep.subr.mxu0 0.0
        %880 = vmatpush1.xpose.msra.mxu0 0.0
        %881 = vmatprep.subr.mxu0 0.0
        %882 = vmatpush1.xpose.msra.mxu0 0.0
        %883 = vmatprep.subr.mxu0 0.0
        %884 = vmatpush1.xpose.msra.mxu0 0.0
        %885 = vmatprep.subr.mxu0 0.0
        %886 = vmatpush1.xpose.msra.mxu0 0.0
        %887 = vmatprep.subr.mxu0 0.0
        %888 = vmatpush1.xpose.msra.mxu0 0.0
        %889 = vmatprep.subr.mxu0 0.0
        %890 = vmatpush1.xpose.msra.mxu0 0.0
        %891 = vmatprep.subr.mxu0 0.0
        %892 = vmatpush1.xpose.msra.mxu0 0.0
        %893 = vmatprep.subr.mxu0 0.0
        %894 = vmatpush1.xpose.msra.mxu0 0.0
        %895 = vmatprep.subr.mxu0 0.0
        %896 = vmatpush1.xpose.msra.mxu0 0.0
        %897 = vmatprep.subr.mxu0 0.0
        %898 = vmatpush1.xpose.msra.mxu0 0.0
        %899 = vmatprep.subr.mxu0 0.0
        %900 = vmatpush1.xpose.msra.mxu0 0.0
        %901 = vmatprep.subr.mxu0 0.0
        %902 = vmatpush1.xpose.msra.mxu0 0.0
        %903 = vmatprep.subr.mxu0 0.0
        %904 = vmatpush1.xpose.msra.mxu0 0.0
        %905 = vmatprep.subr.mxu0 0.0
        %906 = vmatpush1.xpose.msra.mxu0 0.0
        %907 = vmatprep.subr.mxu0 0.0
        %908 = vmatpush1.xpose.msra.mxu0 0.0
        %909 = vmatprep.subr.mxu0 0.0
        %910 = vmatpush1.xpose.msra.mxu0 0.0
        %911 = vmatprep.subr.mxu0 0.0
        %912 = vmatpush1.xpose.msra.mxu0 0.0
        %913 = vmatprep.subr.mxu0 0.0
        %914 = vmatpush1.xpose.msra.mxu0 0.0
        %915 = vmatprep.subr.mxu0 0.0
        %916 = vmatpush1.xpose.msra.mxu0 0.0
        %917 = vmatprep.subr.mxu0 0.0
        %918 = vmatpush1.xpose.msra.mxu0 0.0
        %919 = vmatprep.subr.mxu0 0.0
        %920 = vmatpush1.xpose.msra.mxu0 0.0
        %921 = vmatprep.mubr.f32.mxu0 0.0
        %922 = vmatmul.mubr.f32.gmra.mrb[0].mxu0 %v856
        %v923 = vpop.f32.mrb[0].mxu0
        %v924 = vadd.f32 0.0, %v923
        %v925 = vpop.f32.mrb[0].mxu0
        %926 = vdwg.mxu0
        %927 = vmatprep.subr.mxu0 0.0
        %928 = vmatpush1.xpose.msra.mxu0 %v568
        %929 = vmatprep.subr.mxu0 0.0
        %930 = vmatpush1.xpose.msra.mxu0 %v573
        %931 = vmatprep.subr.mxu0 0.0
        %932 = vmatpush1.xpose.msra.mxu0 %v578
        %933 = vmatprep.subr.mxu0 0.0
        %934 = vmatpush1.xpose.msra.mxu0 %v583
        %935 = vmatprep.subr.mxu0 0.0
        %936 = vmatpush1.xpose.msra.mxu0 0.0
        %937 = vmatprep.subr.mxu0 0.0
        %938 = vmatpush1.xpose.msra.mxu0 0.0
        %939 = vmatprep.subr.mxu0 0.0
        %940 = vmatpush1.xpose.msra.mxu0 0.0
        %941 = vmatprep.subr.mxu0 0.0
        %942 = vmatpush1.xpose.msra.mxu0 0.0
        %943 = vmatprep.subr.mxu0 0.0
        %944 = vmatpush1.xpose.msra.mxu0 0.0
        %945 = vmatprep.subr.mxu0 0.0
        %946 = vmatpush1.xpose.msra.mxu0 0.0
        %947 = vmatprep.subr.mxu0 0.0
        %948 = vmatpush1.xpose.msra.mxu0 0.0
        %949 = vmatprep.subr.mxu0 0.0
        %950 = vmatpush1.xpose.msra.mxu0 0.0
        %951 = vmatprep.subr.mxu0 0.0
        %952 = vmatpush1.xpose.msra.mxu0 0.0
        %953 = vmatprep.subr.mxu0 0.0
        %954 = vmatpush1.xpose.msra.mxu0 0.0
        %955 = vmatprep.subr.mxu0 0.0
        %956 = vmatpush1.xpose.msra.mxu0 0.0
        %957 = vmatprep.subr.mxu0 0.0
        %958 = vmatpush1.xpose.msra.mxu0 0.0
        %959 = vmatprep.subr.mxu0 0.0
        %960 = vmatpush1.xpose.msra.mxu0 0.0
        %961 = vmatprep.subr.mxu0 0.0
        %962 = vmatpush1.xpose.msra.mxu0 0.0
        %963 = vmatprep.subr.mxu0 0.0
        %964 = vmatpush1.xpose.msra.mxu0 0.0
        %965 = vmatprep.subr.mxu0 0.0
        %966 = vmatpush1.xpose.msra.mxu0 0.0
        %967 = vmatprep.subr.mxu0 0.0
        %968 = vmatpush1.xpose.msra.mxu0 0.0
        %969 = vmatprep.subr.mxu0 0.0
        %970 = vmatpush1.xpose.msra.mxu0 0.0
        %971 = vmatprep.subr.mxu0 0.0
        %972 = vmatpush1.xpose.msra.mxu0 0.0
        %973 = vmatprep.subr.mxu0 0.0
        %974 = vmatpush1.xpose.msra.mxu0 0.0
        %975 = vmatprep.subr.mxu0 0.0
        %976 = vmatpush1.xpose.msra.mxu0 0.0
        %977 = vmatprep.subr.mxu0 0.0
        %978 = vmatpush1.xpose.msra.mxu0 0.0
        %979 = vmatprep.subr.mxu0 0.0
        %980 = vmatpush1.xpose.msra.mxu0 0.0
        %981 = vmatprep.subr.mxu0 0.0
        %982 = vmatpush1.xpose.msra.mxu0 0.0
        %983 = vmatprep.subr.mxu0 0.0
        %984 = vmatpush1.xpose.msra.mxu0 0.0
        %985 = vmatprep.subr.mxu0 0.0
        %986 = vmatpush1.xpose.msra.mxu0 0.0
        %987 = vmatprep.subr.mxu0 0.0
        %988 = vmatpush1.xpose.msra.mxu0 0.0
        %989 = vmatprep.subr.mxu0 0.0
        %990 = vmatpush1.xpose.msra.mxu0 0.0
        %991 = vmatprep.mubr.f32.mxu0 0.0
        %992 = vmatmul.mubr.f32.gmra.mrb[0].mxu0 %v856
        %v993 = vpop.f32.mrb[0].mxu0
        %v994 = vadd.f32 0.0, %v993
        %v995 = vpop.f32.mrb[0].mxu0
        %996 = vdwg.mxu0
        %997 = vmatprep.subr.mxu0 0.0
        %998 = vmatpush1.xpose.msra.mxu0 %v693
        %999 = vmatprep.subr.mxu0 0.0
        %1000 = vmatpush1.xpose.msra.mxu0 %v698
        %1001 = vmatprep.subr.mxu0 0.0
        %1002 = vmatpush1.xpose.msra.mxu0 %v703
        %1003 = vmatprep.subr.mxu0 0.0
        %1004 = vmatpush1.xpose.msra.mxu0 %v708
        %1005 = vmatprep.subr.mxu0 0.0
        %1006 = vmatpush1.xpose.msra.mxu0 0.0
        %1007 = vmatprep.subr.mxu0 0.0
        %1008 = vmatpush1.xpose.msra.mxu0 0.0
        %1009 = vmatprep.subr.mxu0 0.0
        %1010 = vmatpush1.xpose.msra.mxu0 0.0
        %1011 = vmatprep.subr.mxu0 0.0
        %1012 = vmatpush1.xpose.msra.mxu0 0.0
        %1013 = vmatprep.subr.mxu0 0.0
        %1014 = vmatpush1.xpose.msra.mxu0 0.0
        %1015 = vmatprep.subr.mxu0 0.0
        %1016 = vmatpush1.xpose.msra.mxu0 0.0
        %1017 = vmatprep.subr.mxu0 0.0
        %1018 = vmatpush1.xpose.msra.mxu0 0.0
        %1019 = vmatprep.subr.mxu0 0.0
        %1020 = vmatpush1.xpose.msra.mxu0 0.0
        %1021 = vmatprep.subr.mxu0 0.0
        %1022 = vmatpush1.xpose.msra.mxu0 0.0
        %1023 = vmatprep.subr.mxu0 0.0
        %1024 = vmatpush1.xpose.msra.mxu0 0.0
        %1025 = vmatprep.subr.mxu0 0.0
        %1026 = vmatpush1.xpose.msra.mxu0 0.0
        %1027 = vmatprep.subr.mxu0 0.0
        %1028 = vmatpush1.xpose.msra.mxu0 0.0
        %1029 = vmatprep.subr.mxu0 0.0
        %1030 = vmatpush1.xpose.msra.mxu0 0.0
        %1031 = vmatprep.subr.mxu0 0.0
        %1032 = vmatpush1.xpose.msra.mxu0 0.0
        %1033 = vmatprep.subr.mxu0 0.0
        %1034 = vmatpush1.xpose.msra.mxu0 0.0
        %1035 = vmatprep.subr.mxu0 0.0
        %1036 = vmatpush1.xpose.msra.mxu0 0.0
        %1037 = vmatprep.subr.mxu0 0.0
        %1038 = vmatpush1.xpose.msra.mxu0 0.0
        %1039 = vmatprep.subr.mxu0 0.0
        %1040 = vmatpush1.xpose.msra.mxu0 0.0
        %1041 = vmatprep.subr.mxu0 0.0
        %1042 = vmatpush1.xpose.msra.mxu0 0.0
        %1043 = vmatprep.subr.mxu0 0.0
        %1044 = vmatpush1.xpose.msra.mxu0 0.0
        %1045 = vmatprep.subr.mxu0 0.0
        %1046 = vmatpush1.xpose.msra.mxu0 0.0
        %1047 = vmatprep.subr.mxu0 0.0
        %1048 = vmatpush1.xpose.msra.mxu0 0.0
        %1049 = vmatprep.subr.mxu0 0.0
        %1050 = vmatpush1.xpose.msra.mxu0 0.0
        %1051 = vmatprep.subr.mxu0 0.0
        %1052 = vmatpush1.xpose.msra.mxu0 0.0
        %1053 = vmatprep.subr.mxu0 0.0
        %1054 = vmatpush1.xpose.msra.mxu0 0.0
        %1055 = vmatprep.subr.mxu0 0.0
        %1056 = vmatpush1.xpose.msra.mxu0 0.0
        %1057 = vmatprep.subr.mxu0 0.0
        %1058 = vmatpush1.xpose.msra.mxu0 0.0
        %1059 = vmatprep.subr.mxu0 0.0
        %1060 = vmatpush1.xpose.msra.mxu0 0.0
        %1061 = vmatprep.mubr.f32.mxu0 0.0
        %1062 = vmatmul.mubr.f32.gmra.mrb[0].mxu0 %v856
        %v1063 = vpop.f32.mrb[0].mxu0
        %v1064 = vadd.f32 0.0, %v1063
        %v1065 = vpop.f32.mrb[0].mxu0
        %1066 = vdwg.mxu0
        %1067 = vmatprep.subr.mxu0 0.0
        %1068 = vmatpush1.xpose.msra.mxu0 %v818
        %1069 = vmatprep.subr.mxu0 0.0
        %1070 = vmatpush1.xpose.msra.mxu0 %v823
        %1071 = vmatprep.subr.mxu0 0.0
        %1072 = vmatpush1.xpose.msra.mxu0 %v828
        %1073 = vmatprep.subr.mxu0 0.0
        %1074 = vmatpush1.xpose.msra.mxu0 %v833
        %1075 = vmatprep.subr.mxu0 0.0
        %1076 = vmatpush1.xpose.msra.mxu0 0.0
        %1077 = vmatprep.subr.mxu0 0.0
        %1078 = vmatpush1.xpose.msra.mxu0 0.0
        %1079 = vmatprep.subr.mxu0 0.0
        %1080 = vmatpush1.xpose.msra.mxu0 0.0
        %1081 = vmatprep.subr.mxu0 0.0
        %1082 = vmatpush1.xpose.msra.mxu0 0.0
        %1083 = vmatprep.subr.mxu0 0.0
        %1084 = vmatpush1.xpose.msra.mxu0 0.0
        %1085 = vmatprep.subr.mxu0 0.0
        %1086 = vmatpush1.xpose.msra.mxu0 0.0
        %1087 = vmatprep.subr.mxu0 0.0
        %1088 = vmatpush1.xpose.msra.mxu0 0.0
        %1089 = vmatprep.subr.mxu0 0.0
        %1090 = vmatpush1.xpose.msra.mxu0 0.0
        %1091 = vmatprep.subr.mxu0 0.0
        %1092 = vmatpush1.xpose.msra.mxu0 0.0
        %1093 = vmatprep.subr.mxu0 0.0
        %1094 = vmatpush1.xpose.msra.mxu0 0.0
        %1095 = vmatprep.subr.mxu0 0.0
        %1096 = vmatpush1.xpose.msra.mxu0 0.0
        %1097 = vmatprep.subr.mxu0 0.0
        %1098 = vmatpush1.xpose.msra.mxu0 0.0
        %1099 = vmatprep.subr.mxu0 0.0
        %1100 = vmatpush1.xpose.msra.mxu0 0.0
        %1101 = vmatprep.subr.mxu0 0.0
        %1102 = vmatpush1.xpose.msra.mxu0 0.0
        %1103 = vmatprep.subr.mxu0 0.0
        %1104 = vmatpush1.xpose.msra.mxu0 0.0
        %1105 = vmatprep.subr.mxu0 0.0
        %1106 = vmatpush1.xpose.msra.mxu0 0.0
        %1107 = vmatprep.subr.mxu0 0.0
        %1108 = vmatpush1.xpose.msra.mxu0 0.0
        %1109 = vmatprep.subr.mxu0 0.0
        %1110 = vmatpush1.xpose.msra.mxu0 0.0
        %1111 = vmatprep.subr.mxu0 0.0
        %1112 = vmatpush1.xpose.msra.mxu0 0.0
        %1113 = vmatprep.subr.mxu0 0.0
        %1114 = vmatpush1.xpose.msra.mxu0 0.0
        %1115 = vmatprep.subr.mxu0 0.0
        %1116 = vmatpush1.xpose.msra.mxu0 0.0
        %1117 = vmatprep.subr.mxu0 0.0
        %1118 = vmatpush1.xpose.msra.mxu0 0.0
        %1119 = vmatprep.subr.mxu0 0.0
        %1120 = vmatpush1.xpose.msra.mxu0 0.0
        %1121 = vmatprep.subr.mxu0 0.0
        %1122 = vmatpush1.xpose.msra.mxu0 0.0
        %1123 = vmatprep.subr.mxu0 0.0
        %1124 = vmatpush1.xpose.msra.mxu0 0.0
        %1125 = vmatprep.subr.mxu0 0.0
        %1126 = vmatpush1.xpose.msra.mxu0 0.0
        %1127 = vmatprep.subr.mxu0 0.0
        %1128 = vmatpush1.xpose.msra.mxu0 0.0
        %1129 = vmatprep.subr.mxu0 0.0
        %1130 = vmatpush1.xpose.msra.mxu0 0.0
        %1131 = vmatprep.mubr.f32.mxu0 0.0
        %1132 = vmatmul.mubr.f32.gmra.mrb[0].mxu0 %v856
        %v1133 = vpop.f32.mrb[0].mxu0
        %v1134 = vadd.f32 0.0, %v1133
        %v1135 = vpop.f32.mrb[0].mxu0
        %1136 = vdwg.mxu0
        %v1138 = vsel %vm319, %v924, 0
        %1140 = vmatprep.subr.mxu0 0.0
        %1141 = vmatpush1.msra.mxu0 %v443
        %1142 = vmatprep.subr.mxu0 0.0
        %1143 = vmatpush1.msra.mxu0 %v448
        %1144 = vmatprep.subr.mxu0 0.0
        %1145 = vmatpush1.msra.mxu0 %v453
        %1146 = vmatprep.subr.mxu0 0.0
        %1147 = vmatpush1.msra.mxu0 %v458
        %1148 = vmatprep.subr.mxu0 0.0
        %1149 = vmatpush1.msra.mxu0 0.0
        %1150 = vmatprep.subr.mxu0 0.0
        %1151 = vmatpush1.msra.mxu0 0.0
        %1152 = vmatprep.subr.mxu0 0.0
        %1153 = vmatpush1.msra.mxu0 0.0
        %1154 = vmatprep.subr.mxu0 0.0
        %1155 = vmatpush1.msra.mxu0 0.0
        %1156 = vmatprep.subr.mxu0 0.0
        %1157 = vmatpush1.msra.mxu0 0.0
        %1158 = vmatprep.subr.mxu0 0.0
        %1159 = vmatpush1.msra.mxu0 0.0
        %1160 = vmatprep.subr.mxu0 0.0
        %1161 = vmatpush1.msra.mxu0 0.0
        %1162 = vmatprep.subr.mxu0 0.0
        %1163 = vmatpush1.msra.mxu0 0.0
        %1164 = vmatprep.subr.mxu0 0.0
        %1165 = vmatpush1.msra.mxu0 0.0
        %1166 = vmatprep.subr.mxu0 0.0
        %1167 = vmatpush1.msra.mxu0 0.0
        %1168 = vmatprep.subr.mxu0 0.0
        %1169 = vmatpush1.msra.mxu0 0.0
        %1170 = vmatprep.subr.mxu0 0.0
        %1171 = vmatpush1.msra.mxu0 0.0
        %1172 = vmatprep.subr.mxu0 0.0
        %1173 = vmatpush1.msra.mxu0 0.0
        %1174 = vmatprep.subr.mxu0 0.0
        %1175 = vmatpush1.msra.mxu0 0.0
        %1176 = vmatprep.subr.mxu0 0.0
        %1177 = vmatpush1.msra.mxu0 0.0
        %1178 = vmatprep.subr.mxu0 0.0
        %1179 = vmatpush1.msra.mxu0 0.0
        %1180 = vmatprep.subr.mxu0 0.0
        %1181 = vmatpush1.msra.mxu0 0.0
        %1182 = vmatprep.subr.mxu0 0.0
        %1183 = vmatpush1.msra.mxu0 0.0
        %1184 = vmatprep.subr.mxu0 0.0
        %1185 = vmatpush1.msra.mxu0 0.0
        %1186 = vmatprep.subr.mxu0 0.0
        %1187 = vmatpush1.msra.mxu0 0.0
        %1188 = vmatprep.subr.mxu0 0.0
        %1189 = vmatpush1.msra.mxu0 0.0
        %1190 = vmatprep.subr.mxu0 0.0
        %1191 = vmatpush1.msra.mxu0 0.0
        %1192 = vmatprep.subr.mxu0 0.0
        %1193 = vmatpush1.msra.mxu0 0.0
        %1194 = vmatprep.subr.mxu0 0.0
        %1195 = vmatpush1.msra.mxu0 0.0
        %1196 = vmatprep.subr.mxu0 0.0
        %1197 = vmatpush1.msra.mxu0 0.0
        %1198 = vmatprep.subr.mxu0 0.0
        %1199 = vmatpush1.msra.mxu0 0.0
        %1200 = vmatprep.subr.mxu0 0.0
        %1201 = vmatpush1.msra.mxu0 0.0
        %1202 = vmatprep.subr.mxu0 0.0
        %1203 = vmatpush1.msra.mxu0 0.0
        %1204 = vmatprep.mubr.f32.mxu0 0.0
        %1205 = vmatmul.mubr.f32.gmra.mrb[0].mxu0 %v1138
        %v1206 = vpop.f32.mrb[0].mxu0
        %v1207 = vadd.f32 0.0, %v1206
        %v1208 = vpop.f32.mrb[0].mxu0
        %1209 = vdwg.mxu0
        %v1211 = vsel %vm319, %v994, 0
        %1213 = vmatprep.subr.mxu0 0.0
        %1214 = vmatpush1.msra.mxu0 %v568
        %1215 = vmatprep.subr.mxu0 0.0
        %1216 = vmatpush1.msra.mxu0 %v573
        %1217 = vmatprep.subr.mxu0 0.0
        %1218 = vmatpush1.msra.mxu0 %v578
        %1219 = vmatprep.subr.mxu0 0.0
        %1220 = vmatpush1.msra.mxu0 %v583
        %1221 = vmatprep.subr.mxu0 0.0
        %1222 = vmatpush1.msra.mxu0 0.0
        %1223 = vmatprep.subr.mxu0 0.0
        %1224 = vmatpush1.msra.mxu0 0.0
        %1225 = vmatprep.subr.mxu0 0.0
        %1226 = vmatpush1.msra.mxu0 0.0
        %1227 = vmatprep.subr.mxu0 0.0
        %1228 = vmatpush1.msra.mxu0 0.0
        %1229 = vmatprep.subr.mxu0 0.0
        %1230 = vmatpush1.msra.mxu0 0.0
        %1231 = vmatprep.subr.mxu0 0.0
        %1232 = vmatpush1.msra.mxu0 0.0
        %1233 = vmatprep.subr.mxu0 0.0
        %1234 = vmatpush1.msra.mxu0 0.0
        %1235 = vmatprep.subr.mxu0 0.0
        %1236 = vmatpush1.msra.mxu0 0.0
        %1237 = vmatprep.subr.mxu0 0.0
        %1238 = vmatpush1.msra.mxu0 0.0
        %1239 = vmatprep.subr.mxu0 0.0
        %1240 = vmatpush1.msra.mxu0 0.0
        %1241 = vmatprep.subr.mxu0 0.0
        %1242 = vmatpush1.msra.mxu0 0.0
        %1243 = vmatprep.subr.mxu0 0.0
        %1244 = vmatpush1.msra.mxu0 0.0
        %1245 = vmatprep.subr.mxu0 0.0
        %1246 = vmatpush1.msra.mxu0 0.0
        %1247 = vmatprep.subr.mxu0 0.0
        %1248 = vmatpush1.msra.mxu0 0.0
        %1249 = vmatprep.subr.mxu0 0.0
        %1250 = vmatpush1.msra.mxu0 0.0
        %1251 = vmatprep.subr.mxu0 0.0
        %1252 = vmatpush1.msra.mxu0 0.0
        %1253 = vmatprep.subr.mxu0 0.0
        %1254 = vmatpush1.msra.mxu0 0.0
        %1255 = vmatprep.subr.mxu0 0.0
        %1256 = vmatpush1.msra.mxu0 0.0
        %1257 = vmatprep.subr.mxu0 0.0
        %1258 = vmatpush1.msra.mxu0 0.0
        %1259 = vmatprep.subr.mxu0 0.0
        %1260 = vmatpush1.msra.mxu0 0.0
        %1261 = vmatprep.subr.mxu0 0.0
        %1262 = vmatpush1.msra.mxu0 0.0
        %1263 = vmatprep.subr.mxu0 0.0
        %1264 = vmatpush1.msra.mxu0 0.0
        %1265 = vmatprep.subr.mxu0 0.0
        %1266 = vmatpush1.msra.mxu0 0.0
        %1267 = vmatprep.subr.mxu0 0.0
        %1268 = vmatpush1.msra.mxu0 0.0
        %1269 = vmatprep.subr.mxu0 0.0
        %1270 = vmatpush1.msra.mxu0 0.0
        %1271 = vmatprep.subr.mxu0 0.0
        %1272 = vmatpush1.msra.mxu0 0.0
        %1273 = vmatprep.subr.mxu0 0.0
        %1274 = vmatpush1.msra.mxu0 0.0
        %1275 = vmatprep.subr.mxu0 0.0
        %1276 = vmatpush1.msra.mxu0 0.0
        %1277 = vmatprep.mubr.f32.mxu0 0.0
        %1278 = vmatmul.mubr.f32.gmra.mrb[0].mxu0 %v1211
        %v1279 = vpop.f32.mrb[0].mxu0
        %v1280 = vadd.f32 0.0, %v1279
        %v1281 = vpop.f32.mrb[0].mxu0
        %1282 = vdwg.mxu0
        %v1284 = vsel %vm319, %v1064, 0
        %1286 = vmatprep.subr.mxu0 0.0
        %1287 = vmatpush1.msra.mxu0 %v693
        %1288 = vmatprep.subr.mxu0 0.0
        %1289 = vmatpush1.msra.mxu0 %v698
        %1290 = vmatprep.subr.mxu0 0.0
        %1291 = vmatpush1.msra.mxu0 %v703
        %1292 = vmatprep.subr.mxu0 0.0
        %1293 = vmatpush1.msra.mxu0 %v708
        %1294 = vmatprep.subr.mxu0 0.0
        %1295 = vmatpush1.msra.mxu0 0.0
        %1296 = vmatprep.subr.mxu0 0.0
        %1297 = vmatpush1.msra.mxu0 0.0
        %1298 = vmatprep.subr.mxu0 0.0
        %1299 = vmatpush1.msra.mxu0 0.0
        %1300 = vmatprep.subr.mxu0 0.0
        %1301 = vmatpush1.msra.mxu0 0.0
        %1302 = vmatprep.subr.mxu0 0.0
        %1303 = vmatpush1.msra.mxu0 0.0
        %1304 = vmatprep.subr.mxu0 0.0
        %1305 = vmatpush1.msra.mxu0 0.0
        %1306 = vmatprep.subr.mxu0 0.0
        %1307 = vmatpush1.msra.mxu0 0.0
        %1308 = vmatprep.subr.mxu0 0.0
        %1309 = vmatpush1.msra.mxu0 0.0
        %1310 = vmatprep.subr.mxu0 0.0
        %1311 = vmatpush1.msra.mxu0 0.0
        %1312 = vmatprep.subr.mxu0 0.0
        %1313 = vmatpush1.msra.mxu0 0.0
        %1314 = vmatprep.subr.mxu0 0.0
        %1315 = vmatpush1.msra.mxu0 0.0
        %1316 = vmatprep.subr.mxu0 0.0
        %1317 = vmatpush1.msra.mxu0 0.0
        %1318 = vmatprep.subr.mxu0 0.0
        %1319 = vmatpush1.msra.mxu0 0.0
        %1320 = vmatprep.subr.mxu0 0.0
        %1321 = vmatpush1.msra.mxu0 0.0
        %1322 = vmatprep.subr.mxu0 0.0
        %1323 = vmatpush1.msra.mxu0 0.0
        %1324 = vmatprep.subr.mxu0 0.0
        %1325 = vmatpush1.msra.mxu0 0.0
        %1326 = vmatprep.subr.mxu0 0.0
        %1327 = vmatpush1.msra.mxu0 0.0
        %1328 = vmatprep.subr.mxu0 0.0
        %1329 = vmatpush1.msra.mxu0 0.0
        %1330 = vmatprep.subr.mxu0 0.0
        %1331 = vmatpush1.msra.mxu0 0.0
        %1332 = vmatprep.subr.mxu0 0.0
        %1333 = vmatpush1.msra.mxu0 0.0
        %1334 = vmatprep.subr.mxu0 0.0
        %1335 = vmatpush1.msra.mxu0 0.0
        %1336 = vmatprep.subr.mxu0 0.0
        %1337 = vmatpush1.msra.mxu0 0.0
        %1338 = vmatprep.subr.mxu0 0.0
        %1339 = vmatpush1.msra.mxu0 0.0
        %1340 = vmatprep.subr.mxu0 0.0
        %1341 = vmatpush1.msra.mxu0 0.0
        %1342 = vmatprep.subr.mxu0 0.0
        %1343 = vmatpush1.msra.mxu0 0.0
        %1344 = vmatprep.subr.mxu0 0.0
        %1345 = vmatpush1.msra.mxu0 0.0
        %1346 = vmatprep.subr.mxu0 0.0
        %1347 = vmatpush1.msra.mxu0 0.0
        %1348 = vmatprep.subr.mxu0 0.0
        %1349 = vmatpush1.msra.mxu0 0.0
        %1350 = vmatprep.mubr.f32.mxu0 0.0
        %1351 = vmatmul.mubr.f32.gmra.mrb[0].mxu0 %v1284
        %v1352 = vpop.f32.mrb[0].mxu0
        %v1353 = vadd.f32 0.0, %v1352
        %v1354 = vpop.f32.mrb[0].mxu0
        %1355 = vdwg.mxu0
        %v1357 = vsel %vm319, %v1134, 0
        %1359 = vmatprep.subr.mxu0 0.0
        %1360 = vmatpush1.msra.mxu0 %v818
        %1361 = vmatprep.subr.mxu0 0.0
        %1362 = vmatpush1.msra.mxu0 %v823
        %1363 = vmatprep.subr.mxu0 0.0
        %1364 = vmatpush1.msra.mxu0 %v828
        %1365 = vmatprep.subr.mxu0 0.0
        %1366 = vmatpush1.msra.mxu0 %v833
        %1367 = vmatprep.subr.mxu0 0.0
        %1368 = vmatpush1.msra.mxu0 0.0
        %1369 = vmatprep.subr.mxu0 0.0
        %1370 = vmatpush1.msra.mxu0 0.0
        %1371 = vmatprep.subr.mxu0 0.0
        %1372 = vmatpush1.msra.mxu0 0.0
        %1373 = vmatprep.subr.mxu0 0.0
        %1374 = vmatpush1.msra.mxu0 0.0
        %1375 = vmatprep.subr.mxu0 0.0
        %1376 = vmatpush1.msra.mxu0 0.0
        %1377 = vmatprep.subr.mxu0 0.0
        %1378 = vmatpush1.msra.mxu0 0.0
        %1379 = vmatprep.subr.mxu0 0.0
        %1380 = vmatpush1.msra.mxu0 0.0
        %1381 = vmatprep.subr.mxu0 0.0
        %1382 = vmatpush1.msra.mxu0 0.0
        %1383 = vmatprep.subr.mxu0 0.0
        %1384 = vmatpush1.msra.mxu0 0.0
        %1385 = vmatprep.subr.mxu0 0.0
        %1386 = vmatpush1.msra.mxu0 0.0
        %1387 = vmatprep.subr.mxu0 0.0
        %1388 = vmatpush1.msra.mxu0 0.0
        %1389 = vmatprep.subr.mxu0 0.0
        %1390 = vmatpush1.msra.mxu0 0.0
        %1391 = vmatprep.subr.mxu0 0.0
        %1392 = vmatpush1.msra.mxu0 0.0
        %1393 = vmatprep.subr.mxu0 0.0
        %1394 = vmatpush1.msra.mxu0 0.0
        %1395 = vmatprep.subr.mxu0 0.0
        %1396 = vmatpush1.msra.mxu0 0.0
        %1397 = vmatprep.subr.mxu0 0.0
        %1398 = vmatpush1.msra.mxu0 0.0
        %1399 = vmatprep.subr.mxu0 0.0
        %1400 = vmatpush1.msra.mxu0 0.0
        %1401 = vmatprep.subr.mxu0 0.0
        %1402 = vmatpush1.msra.mxu0 0.0
        %1403 = vmatprep.subr.mxu0 0.0
        %1404 = vmatpush1.msra.mxu0 0.0
        %1405 = vmatprep.subr.mxu0 0.0
        %1406 = vmatpush1.msra.mxu0 0.0
        %1407 = vmatprep.subr.mxu0 0.0
        %1408 = vmatpush1.msra.mxu0 0.0
        %1409 = vmatprep.subr.mxu0 0.0
        %1410 = vmatpush1.msra.mxu0 0.0
        %1411 = vmatprep.subr.mxu0 0.0
        %1412 = vmatpush1.msra.mxu0 0.0
        %1413 = vmatprep.subr.mxu0 0.0
        %1414 = vmatpush1.msra.mxu0 0.0
        %1415 = vmatprep.subr.mxu0 0.0
        %1416 = vmatpush1.msra.mxu0 0.0
        %1417 = vmatprep.subr.mxu0 0.0
        %1418 = vmatpush1.msra.mxu0 0.0
        %1419 = vmatprep.subr.mxu0 0.0
        %1420 = vmatpush1.msra.mxu0 0.0
        %1421 = vmatprep.subr.mxu0 0.0
        %1422 = vmatpush1.msra.mxu0 0.0
        %1423 = vmatprep.mubr.f32.mxu0 0.0
        %1424 = vmatmul.mubr.f32.gmra.mrb[0].mxu0 %v1357
        %v1425 = vpop.f32.mrb[0].mxu0
        %v1426 = vadd.f32 0.0, %v1425
        %v1427 = vpop.f32.mrb[0].mxu0
        %1428 = vdwg.mxu0
        %vm1429 = vcmask 1044480
        %v1430 = vsel %vm1429, %v1207, -inf
        %1431 = vmax.xlane.f32.xlu0 %v1430
        %v1432 = vpop.xlane.xlu0 %1431
        %v1433 = vsel %vm1429, %v1280, -inf
        %1434 = vmax.xlane.f32.xlu0 %v1433
        %v1435 = vpop.xlane.xlu0 %1434
        %v1436 = vsel %vm1429, %v1353, -inf
        %1437 = vmax.xlane.f32.xlu0 %v1436
        %v1438 = vpop.xlane.xlu0 %1437
        %v1439 = vsel %vm1429, %v1426, -inf
        %1440 = vmax.xlane.f32.xlu0 %v1439
        %v1441 = vpop.xlane.xlu0 %1440
        %v1442 = vsub.f32 %v1207, %v1432
        %v1443 = vsub.f32 %v1280, %v1435
        %v1444 = vsub.f32 %v1353, %v1438
        %v1445 = vsub.f32 %v1426, %v1441
        %v1446 = vmul.f32 %v1442, 1.442695
        %v1447 = vpow.pop %v1446
        %v1448 = vmul.f32 %v1443, 1.442695
        %v1449 = vpow.pop %v1448
        %v1450 = vmul.f32 %v1444, 1.442695
        %v1451 = vpow.pop %v1450
        %v1452 = vmul.f32 %v1445, 1.442695
        %v1453 = vpow.pop %v1452
        %v1454 = vsel %vm1429, %v1447, 0.0
        %1455 = vadd.xlane.f32.xlu0 %v1454
        %v1456 = vpop.xlane.xlu0 %1455
        %v1457 = vsel %vm1429, %v1449, 0.0
        %1458 = vadd.xlane.f32.xlu0 %v1457
        %v1459 = vpop.xlane.xlu0 %1458
        %v1460 = vsel %vm1429, %v1451, 0.0
        %1461 = vadd.xlane.f32.xlu0 %v1460
        %v1462 = vpop.xlane.xlu0 %1461
        %v1463 = vsel %vm1429, %v1453, 0.0
        %1464 = vadd.xlane.f32.xlu0 %v1463
        %v1465 = vpop.xlane.xlu0 %1464
        %v1466 = vrcp.pop %v1456
        %v1467 = vmul.f32 %v1447, %v1466
        %v1468 = vrcp.pop %v1459
        %v1469 = vmul.f32 %v1449, %v1468
        %v1470 = vrcp.pop %v1462
        %v1471 = vmul.f32 %v1451, %v1470
        %v1472 = vrcp.pop %v1465
        %v1473 = vmul.f32 %v1453, %v1472
        %1474 = vmatprep.subr.mxu0 0.0
        %1475 = vmatpush1.xpose.msra.mxu0 %v1467
        %1476 = vmatprep.subr.mxu0 0.0
        %1477 = vmatpush1.xpose.msra.mxu0 0.0
        %1478 = vmatprep.subr.mxu0 0.0
        %1479 = vmatpush1.xpose.msra.mxu0 0.0
        %1480 = vmatprep.subr.mxu0 0.0
        %1481 = vmatpush1.xpose.msra.mxu0 0.0
        %1482 = vmatprep.subr.mxu0 0.0
        %1483 = vmatpush1.xpose.msra.mxu0 0.0
        %1484 = vmatprep.subr.mxu0 0.0
        %1485 = vmatpush1.xpose.msra.mxu0 0.0
        %1486 = vmatprep.subr.mxu0 0.0
        %1487 = vmatpush1.xpose.msra.mxu0 0.0
        %1488 = vmatprep.subr.mxu0 0.0
        %1489 = vmatpush1.xpose.msra.mxu0 0.0
        %1490 = vmatprep.subr.mxu0 0.0
        %1491 = vmatpush1.xpose.msra.mxu0 0.0
        %1492 = vmatprep.subr.mxu0 0.0
        %1493 = vmatpush1.xpose.msra.mxu0 0.0
        %1494 = vmatprep.subr.mxu0 0.0
        %1495 = vmatpush1.xpose.msra.mxu0 0.0
        %1496 = vmatprep.subr.mxu0 0.0
        %1497 = vmatpush1.xpose.msra.mxu0 0.0
        %1498 = vmatprep.subr.mxu0 0.0
        %1499 = vmatpush1.xpose.msra.mxu0 0.0
        %1500 = vmatprep.subr.mxu0 0.0
        %1501 = vmatpush1.xpose.msra.mxu0 0.0
        %1502 = vmatprep.subr.mxu0 0.0
        %1503 = vmatpush1.xpose.msra.mxu0 0.0
        %1504 = vmatprep.subr.mxu0 0.0
        %1505 = vmatpush1.xpose.msra.mxu0 0.0
        %1506 = vmatprep.subr.mxu0 0.0
        %1507 = vmatpush1.xpose.msra.mxu0 0.0
        %1508 = vmatprep.subr.mxu0 0.0
        %1509 = vmatpush1.xpose.msra.mxu0 0.0
        %1510 = vmatprep.subr.mxu0 0.0
        %1511 = vmatpush1.xpose.msra.mxu0 0.0
        %1512 = vmatprep.subr.mxu0 0.0
        %1513 = vmatpush1.xpose.msra.mxu0 0.0
        %1514 = vmatprep.subr.mxu0 0.0
        %1515 = vmatpush1.xpose.msra.mxu0 0.0
        %1516 = vmatprep.subr.mxu0 0.0
        %1517 = vmatpush1.xpose.msra.mxu0 0.0
        %1518 = vmatprep.subr.mxu0 0.0
        %1519 = vmatpush1.xpose.msra.mxu0 0.0
        %1520 = vmatprep.subr.mxu0 0.0
        %1521 = vmatpush1.xpose.msra.mxu0 0.0
        %1522 = vmatprep.subr.mxu0 0.0
        %1523 = vmatpush1.xpose.msra.mxu0 0.0
        %1524 = vmatprep.subr.mxu0 0.0
        %1525 = vmatpush1.xpose.msra.mxu0 0.0
        %1526 = vmatprep.subr.mxu0 0.0
        %1527 = vmatpush1.xpose.msra.mxu0 0.0
        %1528 = vmatprep.subr.mxu0 0.0
        %1529 = vmatpush1.xpose.msra.mxu0 0.0
        %1530 = vmatprep.subr.mxu0 0.0
        %1531 = vmatpush1.xpose.msra.mxu0 0.0
        %1532 = vmatprep.subr.mxu0 0.0
        %1533 = vmatpush1.xpose.msra.mxu0 0.0
        %1534 = vmatprep.subr.mxu0 0.0
        %1535 = vmatpush1.xpose.msra.mxu0 0.0
        %1536 = vmatprep.subr.mxu0 0.0
        %1537 = vmatpush1.xpose.msra.mxu0 0.0
        %1538 = vmatprep.mubr.f32.mxu0 0.0
        %1539 = vmatmul.mubr.f32.gmra.mrb[0].mxu0 %v463
        %v1540 = vpop.f32.mrb[0].mxu0
        %v1541 = vadd.f32 0.0, %v1540
        %v1542 = vpop.f32.mrb[0].mxu0
        %1543 = vmatprep.mubr.f32.mxu0 0.0
        %1544 = vmatmul.mubr.f32.gmra.mrb[0].mxu0 %v468
        %v1545 = vpop.f32.mrb[0].mxu0
        %v1546 = vadd.f32 0.0, %v1545
        %v1547 = vpop.f32.mrb[0].mxu0
        %1548 = vmatprep.mubr.f32.mxu0 0.0
        %1549 = vmatmul.mubr.f32.gmra.mrb[0].mxu0 %v473
        %v1550 = vpop.f32.mrb[0].mxu0
        %v1551 = vadd.f32 0.0, %v1550
        %v1552 = vpop.f32.mrb[0].mxu0
        %1553 = vmatprep.mubr.f32.mxu0 0.0
        %1554 = vmatmul.mubr.f32.gmra.mrb[0].mxu0 %v478
        %v1555 = vpop.f32.mrb[0].mxu0
        %v1556 = vadd.f32 0.0, %v1555
        %v1557 = vpop.f32.mrb[0].mxu0
        %1558 = vdwg.mxu0
        %1559 = vmatprep.subr.mxu0 0.0
        %1560 = vmatpush1.xpose.msra.mxu0 %v1469
        %1561 = vmatprep.subr.mxu0 0.0
        %1562 = vmatpush1.xpose.msra.mxu0 0.0
        %1563 = vmatprep.subr.mxu0 0.0
        %1564 = vmatpush1.xpose.msra.mxu0 0.0
        %1565 = vmatprep.subr.mxu0 0.0
        %1566 = vmatpush1.xpose.msra.mxu0 0.0
        %1567 = vmatprep.subr.mxu0 0.0
        %1568 = vmatpush1.xpose.msra.mxu0 0.0
        %1569 = vmatprep.subr.mxu0 0.0
        %1570 = vmatpush1.xpose.msra.mxu0 0.0
        %1571 = vmatprep.subr.mxu0 0.0
        %1572 = vmatpush1.xpose.msra.mxu0 0.0
        %1573 = vmatprep.subr.mxu0 0.0
        %1574 = vmatpush1.xpose.msra.mxu0 0.0
        %1575 = vmatprep.subr.mxu0 0.0
        %1576 = vmatpush1.xpose.msra.mxu0 0.0
        %1577 = vmatprep.subr.mxu0 0.0
        %1578 = vmatpush1.xpose.msra.mxu0 0.0
        %1579 = vmatprep.subr.mxu0 0.0
        %1580 = vmatpush1.xpose.msra.mxu0 0.0
        %1581 = vmatprep.subr.mxu0 0.0
        %1582 = vmatpush1.xpose.msra.mxu0 0.0
        %1583 = vmatprep.subr.mxu0 0.0
        %1584 = vmatpush1.xpose.msra.mxu0 0.0
        %1585 = vmatprep.subr.mxu0 0.0
        %1586 = vmatpush1.xpose.msra.mxu0 0.0
        %1587 = vmatprep.subr.mxu0 0.0
        %1588 = vmatpush1.xpose.msra.mxu0 0.0
        %1589 = vmatprep.subr.mxu0 0.0
        %1590 = vmatpush1.xpose.msra.mxu0 0.0
        %1591 = vmatprep.subr.mxu0 0.0
        %1592 = vmatpush1.xpose.msra.mxu0 0.0
        %1593 = vmatprep.subr.mxu0 0.0
        %1594 = vmatpush1.xpose.msra.mxu0 0.0
        %1595 = vmatprep.subr.mxu0 0.0
        %1596 = vmatpush1.xpose.msra.mxu0 0.0
        %1597 = vmatprep.subr.mxu0 0.0
        %1598 = vmatpush1.xpose.msra.mxu0 0.0
        %1599 = vmatprep.subr.mxu0 0.0
        %1600 = vmatpush1.xpose.msra.mxu0 0.0
        %1601 = vmatprep.subr.mxu0 0.0
        %1602 = vmatpush1.xpose.msra.mxu0 0.0
        %1603 = vmatprep.subr.mxu0 0.0
        %1604 = vmatpush1.xpose.msra.mxu0 0.0
        %1605 = vmatprep.subr.mxu0 0.0
        %1606 = vmatpush1.xpose.msra.mxu0 0.0
        %1607 = vmatprep.subr.mxu0 0.0
        %1608 = vmatpush1.xpose.msra.mxu0 0.0
        %1609 = vmatprep.subr.mxu0 0.0
        %1610 = vmatpush1.xpose.msra.mxu0 0.0
        %1611 = vmatprep.subr.mxu0 0.0
        %1612 = vmatpush1.xpose.msra.mxu0 0.0
        %1613 = vmatprep.subr.mxu0 0.0
        %1614 = vmatpush1.xpose.msra.mxu0 0.0
        %1615 = vmatprep.subr.mxu0 0.0
        %1616 = vmatpush1.xpose.msra.mxu0 0.0
        %1617 = vmatprep.subr.mxu0 0.0
        %1618 = vmatpush1.xpose.msra.mxu0 0.0
        %1619 = vmatprep.subr.mxu0 0.0
        %1620 = vmatpush1.xpose.msra.mxu0 0.0
        %1621 = vmatprep.subr.mxu0 0.0
        %1622 = vmatpush1.xpose.msra.mxu0 0.0
        %1623 = vmatprep.mubr.f32.mxu0 0.0
        %1624 = vmatmul.mubr.f32.gmra.mrb[0].mxu0 %v588
        %v1625 = vpop.f32.mrb[0].mxu0
        %v1626 = vadd.f32 0.0, %v1625
        %v1627 = vpop.f32.mrb[0].mxu0
        %1628 = vmatprep.mubr.f32.mxu0 0.0
        %1629 = vmatmul.mubr.f32.gmra.mrb[0].mxu0 %v593
        %v1630 = vpop.f32.mrb[0].mxu0
        %v1631 = vadd.f32 0.0, %v1630
        %v1632 = vpop.f32.mrb[0].mxu0
        %1633 = vmatprep.mubr.f32.mxu0 0.0
        %1634 = vmatmul.mubr.f32.gmra.mrb[0].mxu0 %v598
        %v1635 = vpop.f32.mrb[0].mxu0
        %v1636 = vadd.f32 0.0, %v1635
        %v1637 = vpop.f32.mrb[0].mxu0
        %1638 = vmatprep.mubr.f32.mxu0 0.0
        %1639 = vmatmul.mubr.f32.gmra.mrb[0].mxu0 %v603
        %v1640 = vpop.f32.mrb[0].mxu0
        %v1641 = vadd.f32 0.0, %v1640
        %v1642 = vpop.f32.mrb[0].mxu0
        %1643 = vdwg.mxu0
        %1644 = vmatprep.subr.mxu0 0.0
        %1645 = vmatpush1.xpose.msra.mxu0 %v1471
        %1646 = vmatprep.subr.mxu0 0.0
        %1647 = vmatpush1.xpose.msra.mxu0 0.0
        %1648 = vmatprep.subr.mxu0 0.0
        %1649 = vmatpush1.xpose.msra.mxu0 0.0
        %1650 = vmatprep.subr.mxu0 0.0
        %1651 = vmatpush1.xpose.msra.mxu0 0.0
        %1652 = vmatprep.subr.mxu0 0.0
        %1653 = vmatpush1.xpose.msra.mxu0 0.0
        %1654 = vmatprep.subr.mxu0 0.0
        %1655 = vmatpush1.xpose.msra.mxu0 0.0
        %1656 = vmatprep.subr.mxu0 0.0
        %1657 = vmatpush1.xpose.msra.mxu0 0.0
        %1658 = vmatprep.subr.mxu0 0.0
        %1659 = vmatpush1.xpose.msra.mxu0 0.0
        %1660 = vmatprep.subr.mxu0 0.0
        %1661 = vmatpush1.xpose.msra.mxu0 0.0
        %1662 = vmatprep.subr.mxu0 0.0
        %1663 = vmatpush1.xpose.msra.mxu0 0.0
        %1664 = vmatprep.subr.mxu0 0.0
        %1665 = vmatpush1.xpose.msra.mxu0 0.0
        %1666 = vmatprep.subr.mxu0 0.0
        %1667 = vmatpush1.xpose.msra.mxu0 0.0
        %1668 = vmatprep.subr.mxu0 0.0
        %1669 = vmatpush1.xpose.msra.mxu0 0.0
        %1670 = vmatprep.subr.mxu0 0.0
        %1671 = vmatpush1.xpose.msra.mxu0 0.0
        %1672 = vmatprep.subr.mxu0 0.0
        %1673 = vmatpush1.xpose.msra.mxu0 0.0
        %1674 = vmatprep.subr.mxu0 0.0
        %1675 = vmatpush1.xpose.msra.mxu0 0.0
        %1676 = vmatprep.subr.mxu0 0.0
        %1677 = vmatpush1.xpose.msra.mxu0 0.0
        %1678 = vmatprep.subr.mxu0 0.0
        %1679 = vmatpush1.xpose.msra.mxu0 0.0
        %1680 = vmatprep.subr.mxu0 0.0
        %1681 = vmatpush1.xpose.msra.mxu0 0.0
        %1682 = vmatprep.subr.mxu0 0.0
        %1683 = vmatpush1.xpose.msra.mxu0 0.0
        %1684 = vmatprep.subr.mxu0 0.0
        %1685 = vmatpush1.xpose.msra.mxu0 0.0
        %1686 = vmatprep.subr.mxu0 0.0
        %1687 = vmatpush1.xpose.msra.mxu0 0.0
        %1688 = vmatprep.subr.mxu0 0.0
        %1689 = vmatpush1.xpose.msra.mxu0 0.0
        %1690 = vmatprep.subr.mxu0 0.0
        %1691 = vmatpush1.xpose.msra.mxu0 0.0
        %1692 = vmatprep.subr.mxu0 0.0
        %1693 = vmatpush1.xpose.msra.mxu0 0.0
        %1694 = vmatprep.subr.mxu0 0.0
        %1695 = vmatpush1.xpose.msra.mxu0 0.0
        %1696 = vmatprep.subr.mxu0 0.0
        %1697 = vmatpush1.xpose.msra.mxu0 0.0
        %1698 = vmatprep.subr.mxu0 0.0
        %1699 = vmatpush1.xpose.msra.mxu0 0.0
        %1700 = vmatprep.subr.mxu0 0.0
        %1701 = vmatpush1.xpose.msra.mxu0 0.0
        %1702 = vmatprep.subr.mxu0 0.0
        %1703 = vmatpush1.xpose.msra.mxu0 0.0
        %1704 = vmatprep.subr.mxu0 0.0
        %1705 = vmatpush1.xpose.msra.mxu0 0.0
        %1706 = vmatprep.subr.mxu0 0.0
        %1707 = vmatpush1.xpose.msra.mxu0 0.0
        %1708 = vmatprep.mubr.f32.mxu0 0.0
        %1709 = vmatmul.mubr.f32.gmra.mrb[0].mxu0 %v713
        %v1710 = vpop.f32.mrb[0].mxu0
        %v1711 = vadd.f32 0.0, %v1710
        %v1712 = vpop.f32.mrb[0].mxu0
        %1713 = vmatprep.mubr.f32.mxu0 0.0
        %1714 = vmatmul.mubr.f32.gmra.mrb[0].mxu0 %v718
        %v1715 = vpop.f32.mrb[0].mxu0
        %v1716 = vadd.f32 0.0, %v1715
        %v1717 = vpop.f32.mrb[0].mxu0
        %1718 = vmatprep.mubr.f32.mxu0 0.0
        %1719 = vmatmul.mubr.f32.gmra.mrb[0].mxu0 %v723
        %v1720 = vpop.f32.mrb[0].mxu0
        %v1721 = vadd.f32 0.0, %v1720
        %v1722 = vpop.f32.mrb[0].mxu0
        %1723 = vmatprep.mubr.f32.mxu0 0.0
        %1724 = vmatmul.mubr.f32.gmra.mrb[0].mxu0 %v728
        %v1725 = vpop.f32.mrb[0].mxu0
        %v1726 = vadd.f32 0.0, %v1725
        %v1727 = vpop.f32.mrb[0].mxu0
        %1728 = vdwg.mxu0
        %1729 = vmatprep.subr.mxu0 0.0
        %1730 = vmatpush1.xpose.msra.mxu0 %v1473
        %1731 = vmatprep.subr.mxu0 0.0
        %1732 = vmatpush1.xpose.msra.mxu0 0.0
        %1733 = vmatprep.subr.mxu0 0.0
        %1734 = vmatpush1.xpose.msra.mxu0 0.0
        %1735 = vmatprep.subr.mxu0 0.0
        %1736 = vmatpush1.xpose.msra.mxu0 0.0
        %1737 = vmatprep.subr.mxu0 0.0
        %1738 = vmatpush1.xpose.msra.mxu0 0.0
        %1739 = vmatprep.subr.mxu0 0.0
        %1740 = vmatpush1.xpose.msra.mxu0 0.0
        %1741 = vmatprep.subr.mxu0 0.0
        %1742 = vmatpush1.xpose.msra.mxu0 0.0
        %1743 = vmatprep.subr.mxu0 0.0
        %1744 = vmatpush1.xpose.msra.mxu0 0.0
        %1745 = vmatprep.subr.mxu0 0.0
        %1746 = vmatpush1.xpose.msra.mxu0 0.0
        %1747 = vmatprep.subr.mxu0 0.0
        %1748 = vmatpush1.xpose.msra.mxu0 0.0
        %1749 = vmatprep.subr.mxu0 0.0
        %1750 = vmatpush1.xpose.msra.mxu0 0.0
        %1751 = vmatprep.subr.mxu0 0.0
        %1752 = vmatpush1.xpose.msra.mxu0 0.0
        %1753 = vmatprep.subr.mxu0 0.0
        %1754 = vmatpush1.xpose.msra.mxu0 0.0
        %1755 = vmatprep.subr.mxu0 0.0
        %1756 = vmatpush1.xpose.msra.mxu0 0.0
        %1757 = vmatprep.subr.mxu0 0.0
        %1758 = vmatpush1.xpose.msra.mxu0 0.0
        %1759 = vmatprep.subr.mxu0 0.0
        %1760 = vmatpush1.xpose.msra.mxu0 0.0
        %1761 = vmatprep.subr.mxu0 0.0
        %1762 = vmatpush1.xpose.msra.mxu0 0.0
        %1763 = vmatprep.subr.mxu0 0.0
        %1764 = vmatpush1.xpose.msra.mxu0 0.0
        %1765 = vmatprep.subr.mxu0 0.0
        %1766 = vmatpush1.xpose.msra.mxu0 0.0
        %1767 = vmatprep.subr.mxu0 0.0
        %1768 = vmatpush1.xpose.msra.mxu0 0.0
        %1769 = vmatprep.subr.mxu0 0.0
        %1770 = vmatpush1.xpose.msra.mxu0 0.0
        %1771 = vmatprep.subr.mxu0 0.0
        %1772 = vmatpush1.xpose.msra.mxu0 0.0
        %1773 = vmatprep.subr.mxu0 0.0
        %1774 = vmatpush1.xpose.msra.mxu0 0.0
        %1775 = vmatprep.subr.mxu0 0.0
        %1776 = vmatpush1.xpose.msra.mxu0 0.0
        %1777 = vmatprep.subr.mxu0 0.0
        %1778 = vmatpush1.xpose.msra.mxu0 0.0
        %1779 = vmatprep.subr.mxu0 0.0
        %1780 = vmatpush1.xpose.msra.mxu0 0.0
        %1781 = vmatprep.subr.mxu0 0.0
        %1782 = vmatpush1.xpose.msra.mxu0 0.0
        %1783 = vmatprep.subr.mxu0 0.0
        %1784 = vmatpush1.xpose.msra.mxu0 0.0
        %1785 = vmatprep.subr.mxu0 0.0
        %1786 = vmatpush1.xpose.msra.mxu0 0.0
        %1787 = vmatprep.subr.mxu0 0.0
        %1788 = vmatpush1.xpose.msra.mxu0 0.0
        %1789 = vmatprep.subr.mxu0 0.0
        %1790 = vmatpush1.xpose.msra.mxu0 0.0
        %1791 = vmatprep.subr.mxu0 0.0
        %1792 = vmatpush1.xpose.msra.mxu0 0.0
        %1793 = vmatprep.mubr.f32.mxu0 0.0
        %1794 = vmatmul.mubr.f32.gmra.mrb[0].mxu0 %v838
        %v1795 = vpop.f32.mrb[0].mxu0
        %v1796 = vadd.f32 0.0, %v1795
        %v1797 = vpop.f32.mrb[0].mxu0
        %1798 = vmatprep.mubr.f32.mxu0 0.0
        %1799 = vmatmul.mubr.f32.gmra.mrb[0].mxu0 %v843
        %v1800 = vpop.f32.mrb[0].mxu0
        %v1801 = vadd.f32 0.0, %v1800
        %v1802 = vpop.f32.mrb[0].mxu0
        %1803 = vmatprep.mubr.f32.mxu0 0.0
        %1804 = vmatmul.mubr.f32.gmra.mrb[0].mxu0 %v848
        %v1805 = vpop.f32.mrb[0].mxu0
        %v1806 = vadd.f32 0.0, %v1805
        %v1807 = vpop.f32.mrb[0].mxu0
        %1808 = vmatprep.mubr.f32.mxu0 0.0
        %1809 = vmatmul.mubr.f32.gmra.mrb[0].mxu0 %v853
        %v1810 = vpop.f32.mrb[0].mxu0
        %v1811 = vadd.f32 0.0, %v1810
        %v1812 = vpop.f32.mrb[0].mxu0
        %1813 = vdwg.mxu0
        %1814 = vmatprep.subr.mxu0 0.0
        %1815 = vmatpush1.msra.mxu0 %v423
        %1816 = vmatprep.subr.mxu0 0.0
        %1817 = vmatpush1.msra.mxu0 %v428
        %1818 = vmatprep.subr.mxu0 0.0
        %1819 = vmatpush1.msra.mxu0 %v433
        %1820 = vmatprep.subr.mxu0 0.0
        %1821 = vmatpush1.msra.mxu0 %v438
        %1822 = vmatprep.subr.mxu0 0.0
        %1823 = vmatpush1.msra.mxu0 0.0
        %1824 = vmatprep.subr.mxu0 0.0
        %1825 = vmatpush1.msra.mxu0 0.0
        %1826 = vmatprep.subr.mxu0 0.0
        %1827 = vmatpush1.msra.mxu0 0.0
        %1828 = vmatprep.subr.mxu0 0.0
        %1829 = vmatpush1.msra.mxu0 0.0
        %1830 = vmatprep.subr.mxu0 0.0
        %1831 = vmatpush1.msra.mxu0 0.0
        %1832 = vmatprep.subr.mxu0 0.0
        %1833 = vmatpush1.msra.mxu0 0.0
        %1834 = vmatprep.subr.mxu0 0.0
        %1835 = vmatpush1.msra.mxu0 0.0
        %1836 = vmatprep.subr.mxu0 0.0
        %1837 = vmatpush1.msra.mxu0 0.0
        %1838 = vmatprep.subr.mxu0 0.0
        %1839 = vmatpush1.msra.mxu0 0.0
        %1840 = vmatprep.subr.mxu0 0.0
        %1841 = vmatpush1.msra.mxu0 0.0
        %1842 = vmatprep.subr.mxu0 0.0
        %1843 = vmatpush1.msra.mxu0 0.0
        %1844 = vmatprep.subr.mxu0 0.0
        %1845 = vmatpush1.msra.mxu0 0.0
        %1846 = vmatprep.subr.mxu0 0.0
        %1847 = vmatpush1.msra.mxu0 0.0
        %1848 = vmatprep.subr.mxu0 0.0
        %1849 = vmatpush1.msra.mxu0 0.0
        %1850 = vmatprep.subr.mxu0 0.0
        %1851 = vmatpush1.msra.mxu0 0.0
        %1852 = vmatprep.subr.mxu0 0.0
        %1853 = vmatpush1.msra.mxu0 0.0
        %1854 = vmatprep.subr.mxu0 0.0
        %1855 = vmatpush1.msra.mxu0 0.0
        %1856 = vmatprep.subr.mxu0 0.0
        %1857 = vmatpush1.msra.mxu0 0.0
        %1858 = vmatprep.subr.mxu0 0.0
        %1859 = vmatpush1.msra.mxu0 0.0
        %1860 = vmatprep.subr.mxu0 0.0
        %1861 = vmatpush1.msra.mxu0 0.0
        %1862 = vmatprep.subr.mxu0 0.0
        %1863 = vmatpush1.msra.mxu0 0.0
        %1864 = vmatprep.subr.mxu0 0.0
        %1865 = vmatpush1.msra.mxu0 0.0
        %1866 = vmatprep.subr.mxu0 0.0
        %1867 = vmatpush1.msra.mxu0 0.0
        %1868 = vmatprep.subr.mxu0 0.0
        %1869 = vmatpush1.msra.mxu0 0.0
        %1870 = vmatprep.subr.mxu0 0.0
        %1871 = vmatpush1.msra.mxu0 0.0
        %1872 = vmatprep.subr.mxu0 0.0
        %1873 = vmatpush1.msra.mxu0 0.0
        %1874 = vmatprep.subr.mxu0 0.0
        %1875 = vmatpush1.msra.mxu0 0.0
        %1876 = vmatprep.subr.mxu0 0.0
        %1877 = vmatpush1.msra.mxu0 0.0
        %1878 = vmatprep.mubr.f32.mxu0 0.0
        %1879 = vmatmul.mubr.f32.gmra.mrb[0].mxu0 %v1138
        %v1880 = vpop.f32.mrb[0].mxu0
        %v1881 = vadd.f32 0.0, %v1880
        %v1882 = vpop.f32.mrb[0].mxu0
        %1883 = vdwg.mxu0
        %1884 = vmatprep.subr.mxu0 0.0
        %1885 = vmatpush1.msra.mxu0 %v548
        %1886 = vmatprep.subr.mxu0 0.0
        %1887 = vmatpush1.msra.mxu0 %v553
        %1888 = vmatprep.subr.mxu0 0.0
        %1889 = vmatpush1.msra.mxu0 %v558
        %1890 = vmatprep.subr.mxu0 0.0
        %1891 = vmatpush1.msra.mxu0 %v563
        %1892 = vmatprep.subr.mxu0 0.0
        %1893 = vmatpush1.msra.mxu0 0.0
        %1894 = vmatprep.subr.mxu0 0.0
        %1895 = vmatpush1.msra.mxu0 0.0
        %1896 = vmatprep.subr.mxu0 0.0
        %1897 = vmatpush1.msra.mxu0 0.0
        %1898 = vmatprep.subr.mxu0 0.0
        %1899 = vmatpush1.msra.mxu0 0.0
        %1900 = vmatprep.subr.mxu0 0.0
        %1901 = vmatpush1.msra.mxu0 0.0
        %1902 = vmatprep.subr.mxu0 0.0
        %1903 = vmatpush1.msra.mxu0 0.0
        %1904 = vmatprep.subr.mxu0 0.0
        %1905 = vmatpush1.msra.mxu0 0.0
        %1906 = vmatprep.subr.mxu0 0.0
        %1907 = vmatpush1.msra.mxu0 0.0
        %1908 = vmatprep.subr.mxu0 0.0
        %1909 = vmatpush1.msra.mxu0 0.0
        %1910 = vmatprep.subr.mxu0 0.0
        %1911 = vmatpush1.msra.mxu0 0.0
        %1912 = vmatprep.subr.mxu0 0.0
        %1913 = vmatpush1.msra.mxu0 0.0
        %1914 = vmatprep.subr.mxu0 0.0
        %1915 = vmatpush1.msra.mxu0 0.0
        %1916 = vmatprep.subr.mxu0 0.0
        %1917 = vmatpush1.msra.mxu0 0.0
        %1918 = vmatprep.subr.mxu0 0.0
        %1919 = vmatpush1.msra.mxu0 0.0
        %1920 = vmatprep.subr.mxu0 0.0
        %1921 = vmatpush1.msra.mxu0 0.0
        %1922 = vmatprep.subr.mxu0 0.0
        %1923 = vmatpush1.msra.mxu0 0.0
        %1924 = vmatprep.subr.mxu0 0.0
        %1925 = vmatpush1.msra.mxu0 0.0
        %1926 = vmatprep.subr.mxu0 0.0
        %1927 = vmatpush1.msra.mxu0 0.0
        %1928 = vmatprep.subr.mxu0 0.0
        %1929 = vmatpush1.msra.mxu0 0.0
        %1930 = vmatprep.subr.mxu0 0.0
        %1931 = vmatpush1.msra.mxu0 0.0
        %1932 = vmatprep.subr.mxu0 0.0
        %1933 = vmatpush1.msra.mxu0 0.0
        %1934 = vmatprep.subr.mxu0 0.0
        %1935 = vmatpush1.msra.mxu0 0.0
        %1936 = vmatprep.subr.mxu0 0.0
        %1937 = vmatpush1.msra.mxu0 0.0
        %1938 = vmatprep.subr.mxu0 0.0
        %1939 = vmatpush1.msra.mxu0 0.0
        %1940 = vmatprep.subr.mxu0 0.0
        %1941 = vmatpush1.msra.mxu0 0.0
        %1942 = vmatprep.subr.mxu0 0.0
        %1943 = vmatpush1.msra.mxu0 0.0
        %1944 = vmatprep.subr.mxu0 0.0
        %1945 = vmatpush1.msra.mxu0 0.0
        %1946 = vmatprep.subr.mxu0 0.0
        %1947 = vmatpush1.msra.mxu0 0.0
        %1948 = vmatprep.mubr.f32.mxu0 0.0
        %1949 = vmatmul.mubr.f32.gmra.mrb[0].mxu0 %v1211
        %v1950 = vpop.f32.mrb[0].mxu0
        %v1951 = vadd.f32 0.0, %v1950
        %v1952 = vpop.f32.mrb[0].mxu0
        %1953 = vdwg.mxu0
        %1954 = vmatprep.subr.mxu0 0.0
        %1955 = vmatpush1.msra.mxu0 %v673
        %1956 = vmatprep.subr.mxu0 0.0
        %1957 = vmatpush1.msra.mxu0 %v678
        %1958 = vmatprep.subr.mxu0 0.0
        %1959 = vmatpush1.msra.mxu0 %v683
        %1960 = vmatprep.subr.mxu0 0.0
        %1961 = vmatpush1.msra.mxu0 %v688
        %1962 = vmatprep.subr.mxu0 0.0
        %1963 = vmatpush1.msra.mxu0 0.0
        %1964 = vmatprep.subr.mxu0 0.0
        %1965 = vmatpush1.msra.mxu0 0.0
        %1966 = vmatprep.subr.mxu0 0.0
        %1967 = vmatpush1.msra.mxu0 0.0
        %1968 = vmatprep.subr.mxu0 0.0
        %1969 = vmatpush1.msra.mxu0 0.0
        %1970 = vmatprep.subr.mxu0 0.0
        %1971 = vmatpush1.msra.mxu0 0.0
        %1972 = vmatprep.subr.mxu0 0.0
        %1973 = vmatpush1.msra.mxu0 0.0
        %1974 = vmatprep.subr.mxu0 0.0
        %1975 = vmatpush1.msra.mxu0 0.0
        %1976 = vmatprep.subr.mxu0 0.0
        %1977 = vmatpush1.msra.mxu0 0.0
        %1978 = vmatprep.subr.mxu0 0.0
        %1979 = vmatpush1.msra.mxu0 0.0
        %1980 = vmatprep.subr.mxu0 0.0
        %1981 = vmatpush1.msra.mxu0 0.0
        %1982 = vmatprep.subr.mxu0 0.0
        %1983 = vmatpush1.msra.mxu0 0.0
        %1984 = vmatprep.subr.mxu0 0.0
        %1985 = vmatpush1.msra.mxu0 0.0
        %1986 = vmatprep.subr.mxu0 0.0
        %1987 = vmatpush1.msra.mxu0 0.0
        %1988 = vmatprep.subr.mxu0 0.0
        %1989 = vmatpush1.msra.mxu0 0.0
        %1990 = vmatprep.subr.mxu0 0.0
        %1991 = vmatpush1.msra.mxu0 0.0
        %1992 = vmatprep.subr.mxu0 0.0
        %1993 = vmatpush1.msra.mxu0 0.0
        %1994 = vmatprep.subr.mxu0 0.0
        %1995 = vmatpush1.msra.mxu0 0.0
        %1996 = vmatprep.subr.mxu0 0.0
        %1997 = vmatpush1.msra.mxu0 0.0
        %1998 = vmatprep.subr.mxu0 0.0
        %1999 = vmatpush1.msra.mxu0 0.0
        %2000 = vmatprep.subr.mxu0 0.0
        %2001 = vmatpush1.msra.mxu0 0.0
        %2002 = vmatprep.subr.mxu0 0.0
        %2003 = vmatpush1.msra.mxu0 0.0
        %2004 = vmatprep.subr.mxu0 0.0
        %2005 = vmatpush1.msra.mxu0 0.0
        %2006 = vmatprep.subr.mxu0 0.0
        %2007 = vmatpush1.msra.mxu0 0.0
        %2008 = vmatprep.subr.mxu0 0.0
        %2009 = vmatpush1.msra.mxu0 0.0
        %2010 = vmatprep.subr.mxu0 0.0
        %2011 = vmatpush1.msra.mxu0 0.0
        %2012 = vmatprep.subr.mxu0 0.0
        %2013 = vmatpush1.msra.mxu0 0.0
        %2014 = vmatprep.subr.mxu0 0.0
        %2015 = vmatpush1.msra.mxu0 0.0
        %2016 = vmatprep.subr.mxu0 0.0
        %2017 = vmatpush1.msra.mxu0 0.0
        %2018 = vmatprep.mubr.f32.mxu0 0.0
        %2019 = vmatmul.mubr.f32.gmra.mrb[0].mxu0 %v1284
        %v2020 = vpop.f32.mrb[0].mxu0
        %v2021 = vadd.f32 0.0, %v2020
        %v2022 = vpop.f32.mrb[0].mxu0
        %2023 = vdwg.mxu0
        %2024 = vmatprep.subr.mxu0 0.0
        %2025 = vmatpush1.msra.mxu0 %v798
        %2026 = vmatprep.subr.mxu0 0.0
        %2027 = vmatpush1.msra.mxu0 %v803
        %2028 = vmatprep.subr.mxu0 0.0
        %2029 = vmatpush1.msra.mxu0 %v808
        %2030 = vmatprep.subr.mxu0 0.0
        %2031 = vmatpush1.msra.mxu0 %v813
        %2032 = vmatprep.subr.mxu0 0.0
        %2033 = vmatpush1.msra.mxu0 0.0
        %2034 = vmatprep.subr.mxu0 0.0
        %2035 = vmatpush1.msra.mxu0 0.0
        %2036 = vmatprep.subr.mxu0 0.0
        %2037 = vmatpush1.msra.mxu0 0.0
        %2038 = vmatprep.subr.mxu0 0.0
        %2039 = vmatpush1.msra.mxu0 0.0
        %2040 = vmatprep.subr.mxu0 0.0
        %2041 = vmatpush1.msra.mxu0 0.0
        %2042 = vmatprep.subr.mxu0 0.0
        %2043 = vmatpush1.msra.mxu0 0.0
        %2044 = vmatprep.subr.mxu0 0.0
        %2045 = vmatpush1.msra.mxu0 0.0
        %2046 = vmatprep.subr.mxu0 0.0
        %2047 = vmatpush1.msra.mxu0 0.0
        %2048 = vmatprep.subr.mxu0 0.0
        %2049 = vmatpush1.msra.mxu0 0.0
        %2050 = vmatprep.subr.mxu0 0.0
        %2051 = vmatpush1.msra.mxu0 0.0
        %2052 = vmatprep.subr.mxu0 0.0
        %2053 = vmatpush1.msra.mxu0 0.0
        %2054 = vmatprep.subr.mxu0 0.0
        %2055 = vmatpush1.msra.mxu0 0.0
        %2056 = vmatprep.subr.mxu0 0.0
        %2057 = vmatpush1.msra.mxu0 0.0
        %2058 = vmatprep.subr.mxu0 0.0
        %2059 = vmatpush1.msra.mxu0 0.0
        %2060 = vmatprep.subr.mxu0 0.0
        %2061 = vmatpush1.msra.mxu0 0.0
        %2062 = vmatprep.subr.mxu0 0.0
        %2063 = vmatpush1.msra.mxu0 0.0
        %2064 = vmatprep.subr.mxu0 0.0
        %2065 = vmatpush1.msra.mxu0 0.0
        %2066 = vmatprep.subr.mxu0 0.0
        %2067 = vmatpush1.msra.mxu0 0.0
        %2068 = vmatprep.subr.mxu0 0.0
        %2069 = vmatpush1.msra.mxu0 0.0
        %2070 = vmatprep.subr.mxu0 0.0
        %2071 = vmatpush1.msra.mxu0 0.0
        %2072 = vmatprep.subr.mxu0 0.0
        %2073 = vmatpush1.msra.mxu0 0.0
        %2074 = vmatprep.subr.mxu0 0.0
        %2075 = vmatpush1.msra.mxu0 0.0
        %2076 = vmatprep.subr.mxu0 0.0
        %2077 = vmatpush1.msra.mxu0 0.0
        %2078 = vmatprep.subr.mxu0 0.0
        %2079 = vmatpush1.msra.mxu0 0.0
        %2080 = vmatprep.subr.mxu0 0.0
        %2081 = vmatpush1.msra.mxu0 0.0
        %2082 = vmatprep.subr.mxu0 0.0
        %2083 = vmatpush1.msra.mxu0 0.0
        %2084 = vmatprep.subr.mxu0 0.0
        %2085 = vmatpush1.msra.mxu0 0.0
        %2086 = vmatprep.subr.mxu0 0.0
        %2087 = vmatpush1.msra.mxu0 0.0
        %2088 = vmatprep.mubr.f32.mxu0 0.0
        %2089 = vmatmul.mubr.f32.gmra.mrb[0].mxu0 %v1357
        %v2090 = vpop.f32.mrb[0].mxu0
        %v2091 = vadd.f32 0.0, %v2090
        %v2092 = vpop.f32.mrb[0].mxu0
        %2093 = vdwg.mxu0
        %v2094 = vsel %vm1429, %v1881, -inf
        %v2095 = vrot.slane %v2094, 4
        %v2096 = vmax.f32 %v2094, %v2095
        %v2097 = vrot.slane %v2096, 2
        %v2098 = vmax.f32 %v2096, %v2097
        %v2099 = vrot.slane %v2098, 1
        %v2100 = vmax.f32 %v2098, %v2099
        %v2101 = vsel %vm1429, %v1951, -inf
        %v2102 = vrot.slane %v2101, 4
        %v2103 = vmax.f32 %v2101, %v2102
        %v2104 = vrot.slane %v2103, 2
        %v2105 = vmax.f32 %v2103, %v2104
        %v2106 = vrot.slane %v2105, 1
        %v2107 = vmax.f32 %v2105, %v2106
        %v2108 = vsel %vm1429, %v2021, -inf
        %v2109 = vrot.slane %v2108, 4
        %v2110 = vmax.f32 %v2108, %v2109
        %v2111 = vrot.slane %v2110, 2
        %v2112 = vmax.f32 %v2110, %v2111
        %v2113 = vrot.slane %v2112, 1
        %v2114 = vmax.f32 %v2112, %v2113
        %v2115 = vsel %vm1429, %v2091, -inf
        %v2116 = vrot.slane %v2115, 4
        %v2117 = vmax.f32 %v2115, %v2116
        %v2118 = vrot.slane %v2117, 2
        %v2119 = vmax.f32 %v2117, %v2118
        %v2120 = vrot.slane %v2119, 1
        %v2121 = vmax.f32 %v2119, %v2120
        %v2122 = vsub.f32 %v1881, %v2100
        %v2123 = vsub.f32 %v1951, %v2107
        %v2124 = vsub.f32 %v2021, %v2114
        %v2125 = vsub.f32 %v2091, %v2121
        %v2126 = vmul.f32 %v2122, 1.442695
        %v2127 = vpow.pop %v2126
        %v2128 = vmul.f32 %v2123, 1.442695
        %v2129 = vpow.pop %v2128
        %v2130 = vmul.f32 %v2124, 1.442695
        %v2131 = vpow.pop %v2130
        %v2132 = vmul.f32 %v2125, 1.442695
        %v2133 = vpow.pop %v2132
        %v2134 = vsel %vm1429, %v2127, 0.0
        %v2135 = vrot.slane %v2134, 4
        %v2136 = vadd.f32 %v2134, %v2135
        %v2137 = vrot.slane %v2136, 2
        %v2138 = vadd.f32 %v2136, %v2137
        %v2139 = vrot.slane %v2138, 1
        %v2140 = vadd.f32 %v2138, %v2139
        %v2141 = vsel %vm1429, %v2129, 0.0
        %v2142 = vrot.slane %v2141, 4
        %v2143 = vadd.f32 %v2141, %v2142
        %v2144 = vrot.slane %v2143, 2
        %v2145 = vadd.f32 %v2143, %v2144
        %v2146 = vrot.slane %v2145, 1
        %v2147 = vadd.f32 %v2145, %v2146
        %v2148 = vsel %vm1429, %v2131, 0.0
        %v2149 = vrot.slane %v2148, 4
        %v2150 = vadd.f32 %v2148, %v2149
        %v2151 = vrot.slane %v2150, 2
        %v2152 = vadd.f32 %v2150, %v2151
        %v2153 = vrot.slane %v2152, 1
        %v2154 = vadd.f32 %v2152, %v2153
        %v2155 = vsel %vm1429, %v2133, 0.0
        %v2156 = vrot.slane %v2155, 4
        %v2157 = vadd.f32 %v2155, %v2156
        %v2158 = vrot.slane %v2157, 2
        %v2159 = vadd.f32 %v2157, %v2158
        %v2160 = vrot.slane %v2159, 1
        %v2161 = vadd.f32 %v2159, %v2160
        %v2162 = vrcp.pop %v2140
        %v2163 = vmul.f32 %v2127, %v2162
        %v2164 = vrcp.pop %v2147
        %v2165 = vmul.f32 %v2129, %v2164
        %v2166 = vrcp.pop %v2154
        %v2167 = vmul.f32 %v2131, %v2166
        %v2168 = vrcp.pop %v2161
        %v2169 = vmul.f32 %v2133, %v2168
        %vm2170 = vcmask 39936
        %v2172 = vsel %vm2170, %v1541, 0
        %v2175 = vsel %vm2170, %v1546, 0
        %v2178 = vsel %vm2170, %v1551, 0
        %v2181 = vsel %vm2170, %v1556, 0
        %v2184 = vsel %vm1429, %v2163, 0
        %2186 = vmatprep.subr.mxu0 0.0
        %2187 = vmatpush1.msra.mxu0 %v2184
        %2188 = vmatprep.subr.mxu0 0.0
        %2189 = vmatpush1.msra.mxu0 0.0
        %2190 = vmatprep.subr.mxu0 0.0
        %2191 = vmatpush1.msra.mxu0 0.0
        %2192 = vmatprep.subr.mxu0 0.0
        %2193 = vmatpush1.msra.mxu0 0.0
        %2194 = vmatprep.subr.mxu0 0.0
        %2195 = vmatpush1.msra.mxu0 0.0
        %2196 = vmatprep.subr.mxu0 0.0
        %2197 = vmatpush1.msra.mxu0 0.0
        %2198 = vmatprep.subr.mxu0 0.0
        %2199 = vmatpush1.msra.mxu0 0.0
        %2200 = vmatprep.subr.mxu0 0.0
        %2201 = vmatpush1.msra.mxu0 0.0
        %2202 = vmatprep.subr.mxu0 0.0
        %2203 = vmatpush1.msra.mxu0 0.0
        %2204 = vmatprep.subr.mxu0 0.0
        %2205 = vmatpush1.msra.mxu0 0.0
        %2206 = vmatprep.subr.mxu0 0.0
        %2207 = vmatpush1.msra.mxu0 0.0
        %2208 = vmatprep.subr.mxu0 0.0
        %2209 = vmatpush1.msra.mxu0 0.0
        %2210 = vmatprep.subr.mxu0 0.0
        %2211 = vmatpush1.msra.mxu0 0.0
        %2212 = vmatprep.subr.mxu0 0.0
        %2213 = vmatpush1.msra.mxu0 0.0
        %2214 = vmatprep.subr.mxu0 0.0
        %2215 = vmatpush1.msra.mxu0 0.0
        %2216 = vmatprep.subr.mxu0 0.0
        %2217 = vmatpush1.msra.mxu0 0.0
        %2218 = vmatprep.subr.mxu0 0.0
        %2219 = vmatpush1.msra.mxu0 0.0
        %2220 = vmatprep.subr.mxu0 0.0
        %2221 = vmatpush1.msra.mxu0 0.0
        %2222 = vmatprep.subr.mxu0 0.0
        %2223 = vmatpush1.msra.mxu0 0.0
        %2224 = vmatprep.subr.mxu0 0.0
        %2225 = vmatpush1.msra.mxu0 0.0
        %2226 = vmatprep.subr.mxu0 0.0
        %2227 = vmatpush1.msra.mxu0 0.0
        %2228 = vmatprep.subr.mxu0 0.0
        %2229 = vmatpush1.msra.mxu0 0.0
        %2230 = vmatprep.subr.mxu0 0.0
        %2231 = vmatpush1.msra.mxu0 0.0
        %2232 = vmatprep.subr.mxu0 0.0
        %2233 = vmatpush1.msra.mxu0 0.0
        %2234 = vmatprep.subr.mxu0 0.0
        %2235 = vmatpush1.msra.mxu0 0.0
        %2236 = vmatprep.subr.mxu0 0.0
        %2237 = vmatpush1.msra.mxu0 0.0
        %2238 = vmatprep.subr.mxu0 0.0
        %2239 = vmatpush1.msra.mxu0 0.0
        %2240 = vmatprep.subr.mxu0 0.0
        %2241 = vmatpush1.msra.mxu0 0.0
        %2242 = vmatprep.subr.mxu0 0.0
        %2243 = vmatpush1.msra.mxu0 0.0
        %2244 = vmatprep.subr.mxu0 0.0
        %2245 = vmatpush1.msra.mxu0 0.0
        %2246 = vmatprep.subr.mxu0 0.0
        %2247 = vmatpush1.msra.mxu0 0.0
        %2248 = vmatprep.subr.mxu0 0.0
        %2249 = vmatpush1.msra.mxu0 0.0
        %2250 = vmatprep.mubr.f32.mxu0 0.0
        %2251 = vmatmul.mubr.f32.gmra.mrb[0].mxu0 %v2172
        %v2252 = vpop.f32.mrb[0].mxu0
        %v2253 = vadd.f32 0.0, %v2252
        %v2254 = vpop.f32.mrb[0].mxu0
        %2255 = vmatprep.mubr.f32.mxu0 0.0
        %2256 = vmatmul.mubr.f32.gmra.mrb[0].mxu0 %v2175
        %v2257 = vpop.f32.mrb[0].mxu0
        %v2258 = vadd.f32 0.0, %v2257
        %v2259 = vpop.f32.mrb[0].mxu0
        %2260 = vmatprep.mubr.f32.mxu0 0.0
        %2261 = vmatmul.mubr.f32.gmra.mrb[0].mxu0 %v2178
        %v2262 = vpop.f32.mrb[0].mxu0
        %v2263 = vadd.f32 0.0, %v2262
        %v2264 = vpop.f32.mrb[0].mxu0
        %2265 = vmatprep.mubr.f32.mxu0 0.0
        %2266 = vmatmul.mubr.f32.gmra.mrb[0].mxu0 %v2181
        %v2267 = vpop.f32.mrb[0].mxu0
        %v2268 = vadd.f32 0.0, %v2267
        %v2269 = vpop.f32.mrb[0].mxu0
        %2270 = vdwg.mxu0
        %v2272 = vsel %vm2170, %v1626, 0
        %v2275 = vsel %vm2170, %v1631, 0
        %v2278 = vsel %vm2170, %v1636, 0
        %v2281 = vsel %vm2170, %v1641, 0
        %v2284 = vsel %vm1429, %v2165, 0
        %2286 = vmatprep.subr.mxu0 0.0
        %2287 = vmatpush1.msra.mxu0 %v2284
        %2288 = vmatprep.subr.mxu0 0.0
        %2289 = vmatpush1.msra.mxu0 0.0
        %2290 = vmatprep.subr.mxu0 0.0
        %2291 = vmatpush1.msra.mxu0 0.0
        %2292 = vmatprep.subr.mxu0 0.0
        %2293 = vmatpush1.msra.mxu0 0.0
        %2294 = vmatprep.subr.mxu0 0.0
        %2295 = vmatpush1.msra.mxu0 0.0
        %2296 = vmatprep.subr.mxu0 0.0
        %2297 = vmatpush1.msra.mxu0 0.0
        %2298 = vmatprep.subr.mxu0 0.0
        %2299 = vmatpush1.msra.mxu0 0.0
        %2300 = vmatprep.subr.mxu0 0.0
        %2301 = vmatpush1.msra.mxu0 0.0
        %2302 = vmatprep.subr.mxu0 0.0
        %2303 = vmatpush1.msra.mxu0 0.0
        %2304 = vmatprep.subr.mxu0 0.0
        %2305 = vmatpush1.msra.mxu0 0.0
        %2306 = vmatprep.subr.mxu0 0.0
        %2307 = vmatpush1.msra.mxu0 0.0
        %2308 = vmatprep.subr.mxu0 0.0
        %2309 = vmatpush1.msra.mxu0 0.0
        %2310 = vmatprep.subr.mxu0 0.0
        %2311 = vmatpush1.msra.mxu0 0.0
        %2312 = vmatprep.subr.mxu0 0.0
        %2313 = vmatpush1.msra.mxu0 0.0
        %2314 = vmatprep.subr.mxu0 0.0
        %2315 = vmatpush1.msra.mxu0 0.0
        %2316 = vmatprep.subr.mxu0 0.0
        %2317 = vmatpush1.msra.mxu0 0.0
        %2318 = vmatprep.subr.mxu0 0.0
        %2319 = vmatpush1.msra.mxu0 0.0
        %2320 = vmatprep.subr.mxu0 0.0
        %2321 = vmatpush1.msra.mxu0 0.0
        %2322 = vmatprep.subr.mxu0 0.0
        %2323 = vmatpush1.msra.mxu0 0.0
        %2324 = vmatprep.subr.mxu0 0.0
        %2325 = vmatpush1.msra.mxu0 0.0
        %2326 = vmatprep.subr.mxu0 0.0
        %2327 = vmatpush1.msra.mxu0 0.0
        %2328 = vmatprep.subr.mxu0 0.0
        %2329 = vmatpush1.msra.mxu0 0.0
        %2330 = vmatprep.subr.mxu0 0.0
        %2331 = vmatpush1.msra.mxu0 0.0
        %2332 = vmatprep.subr.mxu0 0.0
        %2333 = vmatpush1.msra.mxu0 0.0
        %2334 = vmatprep.subr.mxu0 0.0
        %2335 = vmatpush1.msra.mxu0 0.0
        %2336 = vmatprep.subr.mxu0 0.0
        %2337 = vmatpush1.msra.mxu0 0.0
        %2338 = vmatprep.subr.mxu0 0.0
        %2339 = vmatpush1.msra.mxu0 0.0
        %2340 = vmatprep.subr.mxu0 0.0
        %2341 = vmatpush1.msra.mxu0 0.0
        %2342 = vmatprep.subr.mxu0 0.0
        %2343 = vmatpush1.msra.mxu0 0.0
        %2344 = vmatprep.subr.mxu0 0.0
        %2345 = vmatpush1.msra.mxu0 0.0
        %2346 = vmatprep.subr.mxu0 0.0
        %2347 = vmatpush1.msra.mxu0 0.0
        %2348 = vmatprep.subr.mxu0 0.0
        %2349 = vmatpush1.msra.mxu0 0.0
        %2350 = vmatprep.mubr.f32.mxu0 0.0
        %2351 = vmatmul.mubr.f32.gmra.mrb[0].mxu0 %v2272
        %v2352 = vpop.f32.mrb[0].mxu0
        %v2353 = vadd.f32 0.0, %v2352
        %v2354 = vpop.f32.mrb[0].mxu0
        %2355 = vmatprep.mubr.f32.mxu0 0.0
        %2356 = vmatmul.mubr.f32.gmra.mrb[0].mxu0 %v2275
        %v2357 = vpop.f32.mrb[0].mxu0
        %v2358 = vadd.f32 0.0, %v2357
        %v2359 = vpop.f32.mrb[0].mxu0
        %2360 = vmatprep.mubr.f32.mxu0 0.0
        %2361 = vmatmul.mubr.f32.gmra.mrb[0].mxu0 %v2278
        %v2362 = vpop.f32.mrb[0].mxu0
        %v2363 = vadd.f32 0.0, %v2362
        %v2364 = vpop.f32.mrb[0].mxu0
        %2365 = vmatprep.mubr.f32.mxu0 0.0
        %2366 = vmatmul.mubr.f32.gmra.mrb[0].mxu0 %v2281
        %v2367 = vpop.f32.mrb[0].mxu0
        %v2368 = vadd.f32 0.0, %v2367
        %v2369 = vpop.f32.mrb[0].mxu0
        %2370 = vdwg.mxu0
        %v2372 = vsel %vm2170, %v1711, 0
        %v2375 = vsel %vm2170, %v1716, 0
        %v2378 = vsel %vm2170, %v1721, 0
        %v2381 = vsel %vm2170, %v1726, 0
        %v2384 = vsel %vm1429, %v2167, 0
        %2386 = vmatprep.subr.mxu0 0.0
        %2387 = vmatpush1.msra.mxu0 %v2384
        %2388 = vmatprep.subr.mxu0 0.0
        %2389 = vmatpush1.msra.mxu0 0.0
        %2390 = vmatprep.subr.mxu0 0.0
        %2391 = vmatpush1.msra.mxu0 0.0
        %2392 = vmatprep.subr.mxu0 0.0
        %2393 = vmatpush1.msra.mxu0 0.0
        %2394 = vmatprep.subr.mxu0 0.0
        %2395 = vmatpush1.msra.mxu0 0.0
        %2396 = vmatprep.subr.mxu0 0.0
        %2397 = vmatpush1.msra.mxu0 0.0
        %2398 = vmatprep.subr.mxu0 0.0
        %2399 = vmatpush1.msra.mxu0 0.0
        %2400 = vmatprep.subr.mxu0 0.0
        %2401 = vmatpush1.msra.mxu0 0.0
        %2402 = vmatprep.subr.mxu0 0.0
        %2403 = vmatpush1.msra.mxu0 0.0
        %2404 = vmatprep.subr.mxu0 0.0
        %2405 = vmatpush1.msra.mxu0 0.0
        %2406 = vmatprep.subr.mxu0 0.0
        %2407 = vmatpush1.msra.mxu0 0.0
        %2408 = vmatprep.subr.mxu0 0.0
        %2409 = vmatpush1.msra.mxu0 0.0
        %2410 = vmatprep.subr.mxu0 0.0
        %2411 = vmatpush1.msra.mxu0 0.0
        %2412 = vmatprep.subr.mxu0 0.0
        %2413 = vmatpush1.msra.mxu0 0.0
        %2414 = vmatprep.subr.mxu0 0.0
        %2415 = vmatpush1.msra.mxu0 0.0
        %2416 = vmatprep.subr.mxu0 0.0
        %2417 = vmatpush1.msra.mxu0 0.0
        %2418 = vmatprep.subr.mxu0 0.0
        %2419 = vmatpush1.msra.mxu0 0.0
        %2420 = vmatprep.subr.mxu0 0.0
        %2421 = vmatpush1.msra.mxu0 0.0
        %2422 = vmatprep.subr.mxu0 0.0
        %2423 = vmatpush1.msra.mxu0 0.0
        %2424 = vmatprep.subr.mxu0 0.0
        %2425 = vmatpush1.msra.mxu0 0.0
        %2426 = vmatprep.subr.mxu0 0.0
        %2427 = vmatpush1.msra.mxu0 0.0
        %2428 = vmatprep.subr.mxu0 0.0
        %2429 = vmatpush1.msra.mxu0 0.0
        %2430 = vmatprep.subr.mxu0 0.0
        %2431 = vmatpush1.msra.mxu0 0.0
        %2432 = vmatprep.subr.mxu0 0.0
        %2433 = vmatpush1.msra.mxu0 0.0
        %2434 = vmatprep.subr.mxu0 0.0
        %2435 = vmatpush1.msra.mxu0 0.0
        %2436 = vmatprep.subr.mxu0 0.0
        %2437 = vmatpush1.msra.mxu0 0.0
        %2438 = vmatprep.subr.mxu0 0.0
        %2439 = vmatpush1.msra.mxu0 0.0
        %2440 = vmatprep.subr.mxu0 0.0
        %2441 = vmatpush1.msra.mxu0 0.0
        %2442 = vmatprep.subr.mxu0 0.0
        %2443 = vmatpush1.msra.mxu0 0.0
        %2444 = vmatprep.subr.mxu0 0.0
        %2445 = vmatpush1.msra.mxu0 0.0
        %2446 = vmatprep.subr.mxu0 0.0
        %2447 = vmatpush1.msra.mxu0 0.0
        %2448 = vmatprep.subr.mxu0 0.0
        %2449 = vmatpush1.msra.mxu0 0.0
        %2450 = vmatprep.mubr.f32.mxu0 0.0
        %2451 = vmatmul.mubr.f32.gmra.mrb[0].mxu0 %v2372
        %v2452 = vpop.f32.mrb[0].mxu0
        %v2453 = vadd.f32 0.0, %v2452
        %v2454 = vpop.f32.mrb[0].mxu0
        %2455 = vmatprep.mubr.f32.mxu0 0.0
        %2456 = vmatmul.mubr.f32.gmra.mrb[0].mxu0 %v2375
        %v2457 = vpop.f32.mrb[0].mxu0
        %v2458 = vadd.f32 0.0, %v2457
        %v2459 = vpop.f32.mrb[0].mxu0
        %2460 = vmatprep.mubr.f32.mxu0 0.0
        %2461 = vmatmul.mubr.f32.gmra.mrb[0].mxu0 %v2378
        %v2462 = vpop.f32.mrb[0].mxu0
        %v2463 = vadd.f32 0.0, %v2462
        %v2464 = vpop.f32.mrb[0].mxu0
        %2465 = vmatprep.mubr.f32.mxu0 0.0
        %2466 = vmatmul.mubr.f32.gmra.mrb[0].mxu0 %v2381
        %v2467 = vpop.f32.mrb[0].mxu0
        %v2468 = vadd.f32 0.0, %v2467
        %v2469 = vpop.f32.mrb[0].mxu0
        %2470 = vdwg.mxu0
        %v2472 = vsel %vm2170, %v1796, 0
        %v2475 = vsel %vm2170, %v1801, 0
        %v2478 = vsel %vm2170, %v1806, 0
        %v2481 = vsel %vm2170, %v1811, 0
        %v2484 = vsel %vm1429, %v2169, 0
        %2486 = vmatprep.subr.mxu0 0.0
        %2487 = vmatpush1.msra.mxu0 %v2484
        %2488 = vmatprep.subr.mxu0 0.0
        %2489 = vmatpush1.msra.mxu0 0.0
        %2490 = vmatprep.subr.mxu0 0.0
        %2491 = vmatpush1.msra.mxu0 0.0
        %2492 = vmatprep.subr.mxu0 0.0
        %2493 = vmatpush1.msra.mxu0 0.0
        %2494 = vmatprep.subr.mxu0 0.0
        %2495 = vmatpush1.msra.mxu0 0.0
        %2496 = vmatprep.subr.mxu0 0.0
        %2497 = vmatpush1.msra.mxu0 0.0
        %2498 = vmatprep.subr.mxu0 0.0
        %2499 = vmatpush1.msra.mxu0 0.0
        %2500 = vmatprep.subr.mxu0 0.0
        %2501 = vmatpush1.msra.mxu0 0.0
        %2502 = vmatprep.subr.mxu0 0.0
        %2503 = vmatpush1.msra.mxu0 0.0
        %2504 = vmatprep.subr.mxu0 0.0
        %2505 = vmatpush1.msra.mxu0 0.0
        %2506 = vmatprep.subr.mxu0 0.0
        %2507 = vmatpush1.msra.mxu0 0.0
        %2508 = vmatprep.subr.mxu0 0.0
        %2509 = vmatpush1.msra.mxu0 0.0
        %2510 = vmatprep.subr.mxu0 0.0
        %2511 = vmatpush1.msra.mxu0 0.0
        %2512 = vmatprep.subr.mxu0 0.0
        %2513 = vmatpush1.msra.mxu0 0.0
        %2514 = vmatprep.subr.mxu0 0.0
        %2515 = vmatpush1.msra.mxu0 0.0
        %2516 = vmatprep.subr.mxu0 0.0
        %2517 = vmatpush1.msra.mxu0 0.0
        %2518 = vmatprep.subr.mxu0 0.0
        %2519 = vmatpush1.msra.mxu0 0.0
        %2520 = vmatprep.subr.mxu0 0.0
        %2521 = vmatpush1.msra.mxu0 0.0
        %2522 = vmatprep.subr.mxu0 0.0
        %2523 = vmatpush1.msra.mxu0 0.0
        %2524 = vmatprep.subr.mxu0 0.0
        %2525 = vmatpush1.msra.mxu0 0.0
        %2526 = vmatprep.subr.mxu0 0.0
        %2527 = vmatpush1.msra.mxu0 0.0
        %2528 = vmatprep.subr.mxu0 0.0
        %2529 = vmatpush1.msra.mxu0 0.0
        %2530 = vmatprep.subr.mxu0 0.0
        %2531 = vmatpush1.msra.mxu0 0.0
        %2532 = vmatprep.subr.mxu0 0.0
        %2533 = vmatpush1.msra.mxu0 0.0
        %2534 = vmatprep.subr.mxu0 0.0
        %2535 = vmatpush1.msra.mxu0 0.0
        %2536 = vmatprep.subr.mxu0 0.0
        %2537 = vmatpush1.msra.mxu0 0.0
        %2538 = vmatprep.subr.mxu0 0.0
        %2539 = vmatpush1.msra.mxu0 0.0
        %2540 = vmatprep.subr.mxu0 0.0
        %2541 = vmatpush1.msra.mxu0 0.0
        %2542 = vmatprep.subr.mxu0 0.0
        %2543 = vmatpush1.msra.mxu0 0.0
        %2544 = vmatprep.subr.mxu0 0.0
        %2545 = vmatpush1.msra.mxu0 0.0
        %2546 = vmatprep.subr.mxu0 0.0
        %2547 = vmatpush1.msra.mxu0 0.0
        %2548 = vmatprep.subr.mxu0 0.0
        %2549 = vmatpush1.msra.mxu0 0.0
        %2550 = vmatprep.mubr.f32.mxu0 0.0
        %2551 = vmatmul.mubr.f32.gmra.mrb[0].mxu0 %v2472
        %v2552 = vpop.f32.mrb[0].mxu0
        %v2553 = vadd.f32 0.0, %v2552
        %v2554 = vpop.f32.mrb[0].mxu0
        %2555 = vmatprep.mubr.f32.mxu0 0.0
        %2556 = vmatmul.mubr.f32.gmra.mrb[0].mxu0 %v2475
        %v2557 = vpop.f32.mrb[0].mxu0
        %v2558 = vadd.f32 0.0, %v2557
        %v2559 = vpop.f32.mrb[0].mxu0
        %2560 = vmatprep.mubr.f32.mxu0 0.0
        %2561 = vmatmul.mubr.f32.gmra.mrb[0].mxu0 %v2478
        %v2562 = vpop.f32.mrb[0].mxu0
        %v2563 = vadd.f32 0.0, %v2562
        %v2564 = vpop.f32.mrb[0].mxu0
        %2565 = vmatprep.mubr.f32.mxu0 0.0
        %2566 = vmatmul.mubr.f32.gmra.mrb[0].mxu0 %v2481
        %v2567 = vpop.f32.mrb[0].mxu0
        %v2568 = vadd.f32 0.0, %v2567
        %v2569 = vpop.f32.mrb[0].mxu0
        %2570 = vdwg.mxu0
        %2571 = vst [vmem:[%s216] sm:$0xff] %v2253
        %2572 = vst [vmem:[%s216 + $0x8] sm:$0xff] %v2258
        %2573 = vst [vmem:[%s216 + $0x10] sm:$0xff] %v2263
        %2574 = vst [vmem:[%s216 + $0x18] sm:$0xff] %v2268
        %2575 = vst [vmem:[%s216 + $0x20] sm:$0xff] %v2353
        %2576 = vst [vmem:[%s216 + $0x28] sm:$0xff] %v2358
        %2577 = vst [vmem:[%s216 + $0x30] sm:$0xff] %v2363
        %2578 = vst [vmem:[%s216 + $0x38] sm:$0xff] %v2368
        %2579 = vst [vmem:[%s216 + $0x40] sm:$0xff] %v2453
        %2580 = vst [vmem:[%s216 + $0x48] sm:$0xff] %v2458
        %2581 = vst [vmem:[%s216 + $0x50] sm:$0xff] %v2463
        %2582 = vst [vmem:[%s216 + $0x58] sm:$0xff] %v2468
        %2583 = vst [vmem:[%s216 + $0x60] sm:$0xff] %v2553
        %2584 = vst [vmem:[%s216 + $0x68] sm:$0xff] %v2558
        %2585 = vst [vmem:[%s216 + $0x70] sm:$0xff] %v2563
        %2586 = vst [vmem:[%s216 + $0x78] sm:$0xff] %v2568
        %s2587 = sand.u32 %s118, 1
        %s2588 = scalar_lea.sflag [#allocation4], %s2587
        %s2589 = sand.u32 %s118, 1
        %s2590 = smul.addr %s2589, 128
        %s2591 = scalar_lea.vmem [#allocation5], %s2590
        // Predicated region
        $region41: #{tpu_custom_call.1} parent=35 // pred_check
          %p2592 = pneg %p128
        $region42: #{tpu_custom_call.1} parent=35 // pred_check_branch
          %2594 = sbr.rel (%p2592) target = $region44
        $region43: #{tpu_custom_call.1} parent=35 // pred_region
          %s2595 = smul.u32 4, %s21
          %s2597 = ssub.s32 2048, 2048
          %2598 = vsyncadd %s2588, %s2597
          %s2599 = smul.addr %s2595, 4
          %s2600 = smul.addr %s2599, 128
          %s2601 = scalar_lea.hbm %s4, %s2600
          %s2602 = sshll.u32 %s2591, 4
          %s2603 = int_to_ptr.vmem [resolvable:$true] %s2602
          %2608 = dma.vmem_to_hbm [thread:$0]  %s2603, 2048, %s2601, %s2588, 128, 128, 8
        $region44: #{tpu_custom_call.1} parent=35 // pred_fallthru
          _
      $region36: #{tpu_custom_call.1} parent=5 // pred_fallthru
        _
      %p2609 = scmp.le.s32.totalorder 2, %s16
      // Predicated region
      $region45: #{tpu_custom_call.1} parent=5 // pred_check
        %p2610 = pneg %p2609
      $region46: #{tpu_custom_call.1} parent=5 // pred_check_branch
        %2612 = sbr.rel (%p2610) target = $region48
      $region47: #{tpu_custom_call.1} parent=5 // pred_region
        %s2613 = ssub.s32 %s16, 2
        // Predicated region
        $region49: #{tpu_custom_call.1} parent=47 // pred_check
          %p2614 = pneg %p134
        $region50: #{tpu_custom_call.1} parent=47 // pred_check_branch
          %2616 = sbr.rel (%p2614) target = $region52
        $region51: #{tpu_custom_call.1} parent=47 // pred_region
          %s2617 = sand.u32 %s119, 1
          %s2618 = scalar_lea.sflag [#allocation4], %s2617
          %s2619 = sand.u32 %s119, 1
          %s2620 = smul.addr %s2619, 128
          %s2621 = scalar_lea.vmem [#allocation5], %s2620
          %2622 = dma.done %s2618, 2048
        $region52: #{tpu_custom_call.1} parent=47 // pred_fallthru
          _
      $region48: #{tpu_custom_call.1} parent=5 // pred_fallthru
        _
    $region6: #{tpu_custom_call.1} parent=1 // loop_footer
      %s20 = sadd.s32 1, %s16
    $region7: #{tpu_custom_call.1} parent=1 // loop_footer_branch
      %15 = sbr.rel target = $region3
    $region8: #{tpu_custom_call.1} parent=1 // loop_exit
      _
    %2623 = vsyncpa [#allocation3], 1
    %s2624 = scalar_lea.sflag [#allocation3], 1
    %2625 = vsyncpa %s2624, 1
    %2626 = vsyncpa [#allocation4], 1
    %s2627 = scalar_lea.sflag [#allocation4], 1
    %2628 = vsyncpa %s2627, 1

</llo_original>
